<compile_context>
chip_gen: v7x
topology: tpu7x:2x2x1
jax: 0.10.0
libtpu: 0.0.40
codegen_flags: <defaults>
</compile_context>

<pallas_src>
import math

import jax
import jax.numpy as jnp
from jax.experimental import pallas as pl
from jax.experimental.pallas import tpu as pltpu


def _round_up(x, m):
    return ((x + m - 1) // m) * m


# ----------------------------------------------------------------------------
# Kernel
# ----------------------------------------------------------------------------
def _shaped_reward_kernel(state_ref, action_ref, next_ref, done_ref,
                          w1s_ref, w1a_ref, w1n_ref, b1_ref,
                          w2_ref, b2_ref, w3_ref, b3_ref,
                          out_ref):
    # Layer 1 of the stacked (base | pot(state) | pot(next_state)) MLP.
    # Truncation (target_states) + concat are folded into the weight blocks.
    h1 = jnp.dot(state_ref[...], w1s_ref[...], preferred_element_type=jnp.float32)
    h1 = h1 + jnp.dot(action_ref[...], w1a_ref[...], preferred_element_type=jnp.float32)
    h1 = h1 + jnp.dot(next_ref[...], w1n_ref[...], preferred_element_type=jnp.float32)
    h1 = jnp.maximum(h1 + b1_ref[...], 0.0)                      # (TB, 128) lane-dense

    # Layer 2 (block-diagonal stacked weights, zero-padded to 128 lanes).
    h2 = jnp.dot(h1, w2_ref[...], preferred_element_type=jnp.float32)
    h2 = jnp.maximum(h2 + b2_ref[...], 0.0)                      # (TB, 128)

    # Two heads; discount and (base - pot_s) algebra are pre-folded into w3/b3:
    #   head0 = base - pot(s) + discount*pot(s')
    #   head1 = discount*pot(s')
    #   reward = head0 - done * head1
    heads = jnp.dot(h2, w3_ref[...], preferred_element_type=jnp.float32) + b3_ref[...]
    out_ref[...] = heads[:, 0:1] - done_ref[...] * heads[:, 1:2]


# ----------------------------------------------------------------------------
# Parameter packing (one-time, plain JAX; cacheable)
# ----------------------------------------------------------------------------
def pack_shaped_reward_params(base_params, pot_params, target_states,
                              obs_dim, act_dim, discount, hid=32,
                              stacked_width=128):
    """Stack base + potential MLPs into one 128-wide MLP with 2 heads.

    Truncation (target_states) is folded into the state-weight block; the
    discount factor and the (base - pot_s) combination are folded into the
    head weights so the kernel epilogue is reward = head0 - done*head1.
    """
    w1b, b1b, w2b, b2b, w3b, b3b = base_params   # base: in = n_t + act_dim
    w1p, b1p, w2p, b2p, w3p, b3p = pot_params    # potential: in = obs_dim
    n_t = len(target_states)
    assert len(set(target_states)) == n_t, "target_states must be unique"
    H = stacked_width
    assert H >= 3 * hid
    idx = jnp.asarray(target_states, dtype=jnp.int32)

    # Weights hit by the `state` stream: base block (truncated rows) + pot(state).
    w1_state = jnp.zeros((obs_dim, H), jnp.float32)
    w1_state = w1_state.at[idx, 0:hid].set(w1b[:n_t])
    w1_state = w1_state.at[:, hid:2 * hid].set(w1p)

    # Weights hit by the `action` stream: base block only.
    w1_action = jnp.zeros((act_dim, H), jnp.float32)
    w1_action = w1_action.at[:, 0:hid].set(w1b[n_t:])

    # Weights hit by the `next_state` stream: pot(next_state) block only.
    w1_next = jnp.zeros((obs_dim, H), jnp.float32)
    w1_next = w1_next.at[:, 2 * hid:3 * hid].set(w1p)

    b1 = jnp.zeros((1, H), jnp.float32)
    b1 = b1.at[:, 0:hid].set(b1b)
    b1 = b1.at[:, hid:2 * hid].set(b1p)
    b1 = b1.at[:, 2 * hid:3 * hid].set(b1p)

    w2 = jnp.zeros((H, H), jnp.float32)
    w2 = w2.at[0:hid, 0:hid].set(w2b)
    w2 = w2.at[hid:2 * hid, hid:2 * hid].set(w2p)
    w2 = w2.at[2 * hid:3 * hid, 2 * hid:3 * hid].set(w2p)

    b2 = jnp.zeros((1, H), jnp.float32)
    b2 = b2.at[:, 0:hid].set(b2b)
    b2 = b2.at[:, hid:2 * hid].set(b2p)
    b2 = b2.at[:, 2 * hid:3 * hid].set(b2p)

    # Head 0: base - pot(s) + discount*pot(s');  Head 1: discount*pot(s').
    w3 = jnp.zeros((H, 2), jnp.float32)
    w3 = w3.at[0:hid, 0:1].set(w3b)
    w3 = w3.at[hid:2 * hid, 0:1].set(-w3p)
    w3 = w3.at[2 * hid:3 * hid, 0:1].set(discount * w3p)
    w3 = w3.at[2 * hid:3 * hid, 1:2].set(discount * w3p)
    b3 = jnp.concatenate([b3b - b3p + discount * b3p, discount * b3p], axis=1)  # (1, 2)

    return w1_state, w1_action, w1_next, b1, w2, b2, w3, b3


# ----------------------------------------------------------------------------
# Forward wrapper
# ----------------------------------------------------------------------------
def shaped_reward_net_forward(state, action, next_state, done, packed_params,
                              *, tile_b=4096):
    """Pallas-backed ShapedRewardNet forward. Returns rewards of shape (B,)."""
    B, obs_dim = state.shape
    act_dim = action.shape[1]
    w1s, w1a, w1n, b1, w2, b2, w3, b3 = packed_params
    H = w2.shape[0]
    n_heads = w3.shape[1]

    state_f = state.astype(jnp.float32)
    action_f = action.astype(jnp.float32)
    next_f = next_state.astype(jnp.float32)
    done_f = done.astype(jnp.float32).reshape(B, 1)

    # Batch tile: multiple of 8 sublanes, no wrapper-side padding.  We round
    # *down* to a multiple of 8 (floor 8) so the tile never exceeds B for
    # B >= 8; the trailing partial block (and the B < 8 case, where the single
    # block is larger than the array) is handled by Pallas's masked DMA:
    # garbage rows only reach output rows >= B, which are never written back.
    tb = max(8, min(_round_up(tile_b, 8), (B // 8) * 8 if B >= 8 else 8))
    grid = (pl.cdiv(B, tb),)

    def batch_spec(feat):
        return pl.BlockSpec((tb, feat), lambda i: (i, 0))

    def const_spec(shape):
        # Constant index_map -> DMA'd once, stays resident in VMEM.
        return pl.BlockSpec(shape, lambda i: (0, 0))

    flops = 2 * B * ((2 * obs_dim + act_dim) * H + H * H + H * n_heads)
    bytes_accessed = 4 * (
        B * (2 * obs_dim + act_dim + 1 + 1)
        + w1s.size + w1a.size + w1n.size + w2.size + w3.size
        + b1.size + b2.size + b3.size)

    out = pl.pallas_call(
        _shaped_reward_kernel,
        out_shape=jax.ShapeDtypeStruct((B, 1), jnp.float32),
        grid=grid,
        in_specs=[
            batch_spec(obs_dim),        # state
            batch_spec(act_dim),        # action
            batch_spec(obs_dim),        # next_state
            batch_spec(1),              # done
            const_spec((obs_dim, H)),   # w1_state   (resident)
            const_spec((act_dim, H)),   # w1_action  (resident)
            const_spec((obs_dim, H)),   # w1_next    (resident)
            const_spec((1, H)),         # b1
            const_spec((H, H)),         # w2
            const_spec((1, H)),         # b2
            const_spec((H, n_heads)),   # w3 (discount folded in)
            const_spec((1, n_heads)),   # b3
        ],
        out_specs=pl.BlockSpec((tb, 1), lambda i: (i, 0)),
        compiler_params=pltpu.CompilerParams(
            dimension_semantics=("parallel",),
            vmem_limit_bytes=32 * 1024 * 1024),
        cost_estimate=pl.CostEstimate(
            flops=flops, transcendentals=0, bytes_accessed=bytes_accessed),
    )(state_f, action_f, next_f, done_f, w1s, w1a, w1n, b1, w2, b2, w3, b3)

    return out.reshape(B)


# ----------------------------------------------------------------------------
# Init + reference + test
# ----------------------------------------------------------------------------
def init_mlp_params(key, in_dim, hid_sizes=(32, 32), out_dim=1):
    """Deterministic Kaiming-uniform-ish init (like torch.nn.Linear)."""
    sizes = [in_dim, *hid_sizes, out_dim]
    n_layers = len(sizes) - 1
    keys = jax.random.split(key, 2 * n_layers)
    params = []
    for i in range(n_layers):
        bound = 1.0 / math.sqrt(float(sizes[i]))
        w = jax.random.uniform(keys[2 * i], (sizes[i], sizes[i + 1]),
                               jnp.float32, -bound, bound)
        b = jax.random.uniform(keys[2 * i + 1], (1, sizes[i + 1]),
                               jnp.float32, -bound, bound)
        params += [w, b]
    return tuple(params)


def _mlp_ref(x, params):
    w1, b1, w2, b2, w3, b3 = params
    h = jnp.maximum(x @ w1 + b1, 0.0)
    h = jnp.maximum(h @ w2 + b2, 0.0)
    return (h @ w3 + b3)[:, 0]


def _reference(state, action, next_state, done, base_params, pot_params,
               target_states, discount):
    x_base = jnp.concatenate([state[:, jnp.array(target_states)], action], axis=1)
    base_out = _mlp_ref(x_base, base_params)
    pot_s = _mlp_ref(state, pot_params)
    pot_ns = _mlp_ref(next_state, pot_params)
    return base_out + discount * (1.0 - done) * pot_ns - pot_s


if __name__ == "__main__":
    OBS, ACT, HID = 16, 4, 32
    target_states = (0, 2, 5, 9)
    DISCOUNT = 0.99

    key = jax.random.PRNGKey(0)
    kb, kp, kdata = jax.random.split(key, 3)

    base_in = len(target_states) + ACT
    base_params = init_mlp_params(kb, base_in, (HID, HID), 1)
    pot_params = init_mlp_params(kp, OBS, (HID, HID), 1)
    packed = pack_shaped_reward_params(base_params, pot_params, target_states,
                                       OBS, ACT, DISCOUNT, HID)

    # Test 1: small batch, single exact block (default tile).
    # Test 2: non-divisible batch, multi-step grid with a partial trailing block.
    # Test 3: tiny multiple-of-8 batch.
    for B, tile_b in ((256, 4096), (300, 128), (8, 4096)):
        ks, ka, kns, kd = jax.random.split(jax.random.fold_in(kdata, B), 4)
        state = jax.random.normal(ks, (B, OBS), jnp.float32)
        action = jax.random.normal(ka, (B, ACT), jnp.float32)
        next_state = jax.random.normal(kns, (B, OBS), jnp.float32)
        done = (jax.random.uniform(kd, (B,)) < 0.3).astype(jnp.float32)

        rew = shaped_reward_net_forward(state, action, next_state, done,
                                        packed, tile_b=tile_b)
        rew = jax.block_until_ready(rew)

        ref = _reference(state, action, next_state, done, base_params,
                         pot_params, target_states, DISCOUNT)
        assert rew.shape == (B,), (rew.shape, B)
        assert jnp.allclose(rew, ref, atol=1e-4, rtol=1e-4), \
            float(jnp.max(jnp.abs(rew - ref)))

    print("KERNEL_OK")
</pallas_src>

<mosaic_0001>
module attributes {stable_mosaic.version = 11 : i64} {
  func.func @_shaped_reward_kernel(%arg0: i32, %arg1: memref<256x16xf32, #tpu.memory_space<vmem>>, %arg2: memref<256x4xf32, #tpu.memory_space<vmem>>, %arg3: memref<256x16xf32, #tpu.memory_space<vmem>>, %arg4: memref<256x1xf32, #tpu.memory_space<vmem>>, %arg5: memref<16x128xf32, #tpu.memory_space<vmem>>, %arg6: memref<4x128xf32, #tpu.memory_space<vmem>>, %arg7: memref<16x128xf32, #tpu.memory_space<vmem>>, %arg8: memref<1x128xf32, #tpu.memory_space<vmem>>, %arg9: memref<128x128xf32, #tpu.memory_space<vmem>>, %arg10: memref<1x128xf32, #tpu.memory_space<vmem>>, %arg11: memref<128x2xf32, #tpu.memory_space<vmem>>, %arg12: memref<1x2xf32, #tpu.memory_space<vmem>>, %arg13: memref<256x1xf32, #tpu.memory_space<vmem>>) attributes {dimension_semantics = [#tpu.dimension_semantics<parallel>], iteration_bounds = array<i64: 1>, scalar_prefetch = 0 : i64, scratch_operands = 0 : i64, tpu.core_type = #tpu.core_type<tc>, window_params = [{transform_indices = @transform_0, window_bounds = array<i64: 256, 16>}, {transform_indices = @transform_1, window_bounds = array<i64: 256, 4>}, {transform_indices = @transform_2, window_bounds = array<i64: 256, 16>}, {transform_indices = @transform_3, window_bounds = array<i64: 256, 1>}, {pipeline_mode = #tpu.pipeline_mode<synchronous>, transform_indices = @transform_4, window_bounds = array<i64: 16, 128>}, {pipeline_mode = #tpu.pipeline_mode<synchronous>, transform_indices = @transform_5, window_bounds = array<i64: 4, 128>}, {pipeline_mode = #tpu.pipeline_mode<synchronous>, transform_indices = @transform_6, window_bounds = array<i64: 16, 128>}, {pipeline_mode = #tpu.pipeline_mode<synchronous>, transform_indices = @transform_7, window_bounds = array<i64: 1, 128>}, {pipeline_mode = #tpu.pipeline_mode<synchronous>, transform_indices = @transform_8, window_bounds = array<i64: 128, 128>}, {pipeline_mode = #tpu.pipeline_mode<synchronous>, transform_indices = @transform_9, window_bounds = array<i64: 1, 128>}, {pipeline_mode = #tpu.pipeline_mode<synchronous>, transform_indices = @transform_10, window_bounds = array<i64: 128, 2>}, {pipeline_mode = #tpu.pipeline_mode<synchronous>, transform_indices = @transform_11, window_bounds = array<i64: 1, 2>}, {transform_indices = @transform_12, window_bounds = array<i64: 256, 1>}]} {
    %c0 = arith.constant 0 : index
    %c0_0 = arith.constant 0 : index
    %0 = vector.load %arg1[%c0, %c0_0] : memref<256x16xf32, #tpu.memory_space<vmem>>, vector<256x16xf32>
    %c0_1 = arith.constant 0 : index
    %c0_2 = arith.constant 0 : index
    %1 = vector.load %arg5[%c0_1, %c0_2] : memref<16x128xf32, #tpu.memory_space<vmem>>, vector<16x128xf32>
    %cst = arith.constant dense<0.000000e+00> : vector<256x128xf32>
    %2 = tpu.matmul %0, %1, %cst {dimension_numbers = #tpu.dot_dimension_numbers<[1], [0], [0], [1], [0, 0, 1, 1], [], []>} : vector<256x16xf32>, vector<16x128xf32>, vector<256x128xf32> -> vector<256x128xf32>
    %c0_3 = arith.constant 0 : index
    %c0_4 = arith.constant 0 : index
    %3 = vector.load %arg2[%c0_3, %c0_4] : memref<256x4xf32, #tpu.memory_space<vmem>>, vector<256x4xf32>
    %c0_5 = arith.constant 0 : index
    %c0_6 = arith.constant 0 : index
    %4 = vector.load %arg6[%c0_5, %c0_6] : memref<4x128xf32, #tpu.memory_space<vmem>>, vector<4x128xf32>
    %cst_7 = arith.constant dense<0.000000e+00> : vector<256x128xf32>
    %5 = tpu.matmul %3, %4, %cst_7 {dimension_numbers = #tpu.dot_dimension_numbers<[1], [0], [0], [1], [0, 0, 1, 1], [], []>} : vector<256x4xf32>, vector<4x128xf32>, vector<256x128xf32> -> vector<256x128xf32>
    %6 = arith.addf %2, %5 : vector<256x128xf32>
    %c0_8 = arith.constant 0 : index
    %c0_9 = arith.constant 0 : index
    %7 = vector.load %arg3[%c0_8, %c0_9] : memref<256x16xf32, #tpu.memory_space<vmem>>, vector<256x16xf32>
    %c0_10 = arith.constant 0 : index
    %c0_11 = arith.constant 0 : index
    %8 = vector.load %arg7[%c0_10, %c0_11] : memref<16x128xf32, #tpu.memory_space<vmem>>, vector<16x128xf32>
    %cst_12 = arith.constant dense<0.000000e+00> : vector<256x128xf32>
    %9 = tpu.matmul %7, %8, %cst_12 {dimension_numbers = #tpu.dot_dimension_numbers<[1], [0], [0], [1], [0, 0, 1, 1], [], []>} : vector<256x16xf32>, vector<16x128xf32>, vector<256x128xf32> -> vector<256x128xf32>
    %10 = arith.addf %6, %9 : vector<256x128xf32>
    %c0_13 = arith.constant 0 : index
    %c0_14 = arith.constant 0 : index
    %11 = vector.load %arg8[%c0_13, %c0_14] : memref<1x128xf32, #tpu.memory_space<vmem>>, vector<1x128xf32>
    %12 = vector.broadcast %11 : vector<1x128xf32> to vector<256x128xf32>
    %13 = arith.addf %10, %12 : vector<256x128xf32>
    %cst_15 = arith.constant 0.000000e+00 : f32
    %14 = vector.broadcast %cst_15 : f32 to vector<256x128xf32>
    %15 = arith.maximumf %13, %14 : vector<256x128xf32>
    %c0_16 = arith.constant 0 : index
    %c0_17 = arith.constant 0 : index
    %16 = vector.load %arg9[%c0_16, %c0_17] : memref<128x128xf32, #tpu.memory_space<vmem>>, vector<128x128xf32>
    %cst_18 = arith.constant dense<0.000000e+00> : vector<256x128xf32>
    %17 = tpu.matmul %15, %16, %cst_18 {dimension_numbers = #tpu.dot_dimension_numbers<[1], [0], [0], [1], [0, 0, 1, 1], [], []>} : vector<256x128xf32>, vector<128x128xf32>, vector<256x128xf32> -> vector<256x128xf32>
    %c0_19 = arith.constant 0 : index
    %c0_20 = arith.constant 0 : index
    %18 = vector.load %arg10[%c0_19, %c0_20] : memref<1x128xf32, #tpu.memory_space<vmem>>, vector<1x128xf32>
    %19 = vector.broadcast %18 : vector<1x128xf32> to vector<256x128xf32>
    %20 = arith.addf %17, %19 : vector<256x128xf32>
    %cst_21 = arith.constant 0.000000e+00 : f32
    %21 = vector.broadcast %cst_21 : f32 to vector<256x128xf32>
    %22 = arith.maximumf %20, %21 : vector<256x128xf32>
    %c0_22 = arith.constant 0 : index
    %c0_23 = arith.constant 0 : index
    %23 = vector.load %arg11[%c0_22, %c0_23] : memref<128x2xf32, #tpu.memory_space<vmem>>, vector<128x2xf32>
    %cst_24 = arith.constant dense<0.000000e+00> : vector<256x2xf32>
    %24 = tpu.matmul %22, %23, %cst_24 {dimension_numbers = #tpu.dot_dimension_numbers<[1], [0], [0], [1], [0, 0, 1, 1], [], []>} : vector<256x128xf32>, vector<128x2xf32>, vector<256x2xf32> -> vector<256x2xf32>
    %c0_25 = arith.constant 0 : index
    %c0_26 = arith.constant 0 : index
    %25 = vector.load %arg12[%c0_25, %c0_26] : memref<1x2xf32, #tpu.memory_space<vmem>>, vector<1x2xf32>
    %26 = vector.broadcast %25 : vector<1x2xf32> to vector<256x2xf32>
    %27 = arith.addf %24, %26 : vector<256x2xf32>
    %28 = vector.extract_strided_slice %27 {offsets = [0, 0], sizes = [256, 1], strides = [1, 1]} : vector<256x2xf32> to vector<256x1xf32>
    %c0_27 = arith.constant 0 : index
    %c0_28 = arith.constant 0 : index
    %29 = vector.load %arg4[%c0_27, %c0_28] : memref<256x1xf32, #tpu.memory_space<vmem>>, vector<256x1xf32>
    %30 = vector.extract_strided_slice %27 {offsets = [0, 1], sizes = [256, 1], strides = [1, 1]} : vector<256x2xf32> to vector<256x1xf32>
    %31 = arith.mulf %29, %30 : vector<256x1xf32>
    %32 = arith.subf %28, %31 : vector<256x1xf32>
    %c0_29 = arith.constant 0 : index
    %c0_30 = arith.constant 0 : index
    %33 = vector.load %arg13[%c0_29, %c0_30] : memref<256x1xf32, #tpu.memory_space<vmem>>, vector<256x1xf32>
    tpu.vector_store %arg13[%c0_29, %c0_30], %32 {strides = array<i32>} : memref<256x1xf32, #tpu.memory_space<vmem>>, vector<256x1xf32>,
    return
  }
  func.func @transform_0(%arg0: i32) -> (i32, i32) {
    %c0_i32 = arith.constant 0 : i32
    %c0_i32_0 = arith.constant 0 : i32
    return %arg0, %c0_i32 : i32, i32
  }
  func.func @transform_1(%arg0: i32) -> (i32, i32) {
    %c0_i32 = arith.constant 0 : i32
    %c0_i32_0 = arith.constant 0 : i32
    return %arg0, %c0_i32 : i32, i32
  }
  func.func @transform_2(%arg0: i32) -> (i32, i32) {
    %c0_i32 = arith.constant 0 : i32
    %c0_i32_0 = arith.constant 0 : i32
    return %arg0, %c0_i32 : i32, i32
  }
  func.func @transform_3(%arg0: i32) -> (i32, i32) {
    %c0_i32 = arith.constant 0 : i32
    %c0_i32_0 = arith.constant 0 : i32
    return %arg0, %c0_i32 : i32, i32
  }
  func.func @transform_4(%arg0: i32) -> (i32, i32) {
    %c0_i32 = arith.constant 0 : i32
    %c0_i32_0 = arith.constant 0 : i32
    %c0_i32_1 = arith.constant 0 : i32
    return %c0_i32, %c0_i32_0 : i32, i32
  }
  func.func @transform_5(%arg0: i32) -> (i32, i32) {
    %c0_i32 = arith.constant 0 : i32
    %c0_i32_0 = arith.constant 0 : i32
    %c0_i32_1 = arith.constant 0 : i32
    return %c0_i32, %c0_i32_0 : i32, i32
  }
  func.func @transform_6(%arg0: i32) -> (i32, i32) {
    %c0_i32 = arith.constant 0 : i32
    %c0_i32_0 = arith.constant 0 : i32
    %c0_i32_1 = arith.constant 0 : i32
    return %c0_i32, %c0_i32_0 : i32, i32
  }
  func.func @transform_7(%arg0: i32) -> (i32, i32) {
    %c0_i32 = arith.constant 0 : i32
    %c0_i32_0 = arith.constant 0 : i32
    %c0_i32_1 = arith.constant 0 : i32
    return %c0_i32, %c0_i32_0 : i32, i32
  }
  func.func @transform_8(%arg0: i32) -> (i32, i32) {
    %c0_i32 = arith.constant 0 : i32
    %c0_i32_0 = arith.constant 0 : i32
    %c0_i32_1 = arith.constant 0 : i32
    return %c0_i32, %c0_i32_0 : i32, i32
  }
  func.func @transform_9(%arg0: i32) -> (i32, i32) {
    %c0_i32 = arith.constant 0 : i32
    %c0_i32_0 = arith.constant 0 : i32
    %c0_i32_1 = arith.constant 0 : i32
    return %c0_i32, %c0_i32_0 : i32, i32
  }
  func.func @transform_10(%arg0: i32) -> (i32, i32) {
    %c0_i32 = arith.constant 0 : i32
    %c0_i32_0 = arith.constant 0 : i32
    %c0_i32_1 = arith.constant 0 : i32
    return %c0_i32, %c0_i32_0 : i32, i32
  }
  func.func @transform_11(%arg0: i32) -> (i32, i32) {
    %c0_i32 = arith.constant 0 : i32
    %c0_i32_0 = arith.constant 0 : i32
    %c0_i32_1 = arith.constant 0 : i32
    return %c0_i32, %c0_i32_0 : i32, i32
  }
  func.func @transform_12(%arg0: i32) -> (i32, i32) {
    %c0_i32 = arith.constant 0 : i32
    %c0_i32_0 = arith.constant 0 : i32
    return %arg0, %c0_i32 : i32, i32
  }
}

</mosaic_0001>

<llo_original>
// kernel: tpu_custom_call.1
$region0: #{tpu_custom_call.1}
  #allocation0 [shape = 'u32[]', space=smem, size = 0x4, offset = 0x4, fixed_abs, tag = 'smem constant byte address 0x4 - core index']
  #allocation1 [shape = 'u32[144,128]{1,0:T(1,128)}', space=vmem, size = 0x12000, scoped, tag = 'internal scratch']
  %s0 = inlined_call_operand.vmem [shape: f32[256,16], index: 0, kind: input, shape index: {}]
  %s1 = inlined_call_operand.vmem [shape: f32[256,4], index: 1, kind: input, shape index: {}]
  %s2 = inlined_call_operand.vmem [shape: f32[256,16], index: 2, kind: input, shape index: {}]
  %s3 = inlined_call_operand.vmem [shape: f32[256,1], index: 3, kind: input, shape index: {}]
  %s4 = inlined_call_operand.vmem [shape: f32[16,128], index: 4, kind: input, shape index: {}]
  %s5 = inlined_call_operand.vmem [shape: f32[4,128], index: 5, kind: input, shape index: {}]
  %s6 = inlined_call_operand.vmem [shape: f32[16,128], index: 6, kind: input, shape index: {}]
  %s7 = inlined_call_operand.vmem [shape: f32[1,128], index: 7, kind: input, shape index: {}]
  %s8 = inlined_call_operand.vmem [shape: f32[128,128], index: 8, kind: input, shape index: {}]
  %s9 = inlined_call_operand.vmem [shape: f32[1,128], index: 9, kind: input, shape index: {}]
  %s10 = inlined_call_operand.vmem [shape: f32[128,2], index: 10, kind: input, shape index: {}]
  %s11 = inlined_call_operand.vmem [shape: f32[1,2], index: 11, kind: input, shape index: {}]
  %s12 = inlined_call_operand.vmem [shape: f32[256,1], index: 12, kind: output, shape index: {}]
  %s13 = sld [smem:[#allocation0]]
  $region58: #{tpu_custom_call.1} parent=0
    _
  %s15 = ssub.s32 1, %s13
  %s16 = scalar_select 0, %s15, %s13
  // Predicated region
  $region2: #{tpu_custom_call.1} parent=0 // pred_check
    _
  $region3: #{tpu_custom_call.1} parent=0 // pred_check_branch
    %18 = sbr.rel (0) target = $region5
  $region4: #{tpu_custom_call.1} parent=0 // pred_region
    _
  $region5: #{tpu_custom_call.1} parent=0 // pred_fallthru
    _
  // Predicated region
  $region6: #{tpu_custom_call.1} parent=0 // pred_check
    _
  $region7: #{tpu_custom_call.1} parent=0 // pred_check_branch
    %20 = sbr.rel (0) target = $region9
  $region8: #{tpu_custom_call.1} parent=0 // pred_region
    _
  $region9: #{tpu_custom_call.1} parent=0 // pred_fallthru
    _
  // Predicated region
  $region10: #{tpu_custom_call.1} parent=0 // pred_check
    _
  $region11: #{tpu_custom_call.1} parent=0 // pred_check_branch
    %22 = sbr.rel (0) target = $region13
  $region12: #{tpu_custom_call.1} parent=0 // pred_region
    _
  $region13: #{tpu_custom_call.1} parent=0 // pred_fallthru
    _
  // Predicated region
  $region14: #{tpu_custom_call.1} parent=0 // pred_check
    _
  $region15: #{tpu_custom_call.1} parent=0 // pred_check_branch
    %24 = sbr.rel (0) target = $region17
  $region16: #{tpu_custom_call.1} parent=0 // pred_region
    _
  $region17: #{tpu_custom_call.1} parent=0 // pred_fallthru
    _
  // Predicated region
  $region18: #{tpu_custom_call.1} parent=0 // pred_check
    _
  $region19: #{tpu_custom_call.1} parent=0 // pred_check_branch
    %26 = sbr.rel (0) target = $region21
  $region20: #{tpu_custom_call.1} parent=0 // pred_region
    _
  $region21: #{tpu_custom_call.1} parent=0 // pred_fallthru
    _
  // Predicated region
  $region22: #{tpu_custom_call.1} parent=0 // pred_check
    _
  $region23: #{tpu_custom_call.1} parent=0 // pred_check_branch
    %28 = sbr.rel (0) target = $region25
  $region24: #{tpu_custom_call.1} parent=0 // pred_region
    _
  $region25: #{tpu_custom_call.1} parent=0 // pred_fallthru
    _
  // Predicated region
  $region26: #{tpu_custom_call.1} parent=0 // pred_check
    _
  $region27: #{tpu_custom_call.1} parent=0 // pred_check_branch
    %30 = sbr.rel (0) target = $region29
  $region28: #{tpu_custom_call.1} parent=0 // pred_region
    _
  $region29: #{tpu_custom_call.1} parent=0 // pred_fallthru
    _
  // Predicated region
  $region30: #{tpu_custom_call.1} parent=0 // pred_check
    _
  $region31: #{tpu_custom_call.1} parent=0 // pred_check_branch
    %32 = sbr.rel (0) target = $region33
  $region32: #{tpu_custom_call.1} parent=0 // pred_region
    _
  $region33: #{tpu_custom_call.1} parent=0 // pred_fallthru
    _
  // Predicated region
  $region34: #{tpu_custom_call.1} parent=0 // pred_check
    _
  $region35: #{tpu_custom_call.1} parent=0 // pred_check_branch
    %34 = sbr.rel (0) target = $region37
  $region36: #{tpu_custom_call.1} parent=0 // pred_region
    _
  $region37: #{tpu_custom_call.1} parent=0 // pred_fallthru
    _
  // Predicated region
  $region38: #{tpu_custom_call.1} parent=0 // pred_check
    _
  $region39: #{tpu_custom_call.1} parent=0 // pred_check_branch
    %36 = sbr.rel (0) target = $region41
  $region40: #{tpu_custom_call.1} parent=0 // pred_region
    _
  $region41: #{tpu_custom_call.1} parent=0 // pred_fallthru
    _
  // Predicated region
  $region42: #{tpu_custom_call.1} parent=0 // pred_check
    _
  $region43: #{tpu_custom_call.1} parent=0 // pred_check_branch
    %38 = sbr.rel (0) target = $region45
  $region44: #{tpu_custom_call.1} parent=0 // pred_region
    _
  $region45: #{tpu_custom_call.1} parent=0 // pred_fallthru
    _
  // Predicated region
  $region46: #{tpu_custom_call.1} parent=0 // pred_check
    _
  $region47: #{tpu_custom_call.1} parent=0 // pred_check_branch
    %40 = sbr.rel (0) target = $region49
  $region48: #{tpu_custom_call.1} parent=0 // pred_region
    _
  $region49: #{tpu_custom_call.1} parent=0 // pred_fallthru
    _
  %v41 = vld [vmem:[%s0] sm:$0xff]
  %v42 = vld [vmem:[%s0 + $0x8] sm:$0xff]
  %v43 = vld [vmem:[%s0 + $0x10] sm:$0xff]
  %v44 = vld [vmem:[%s0 + $0x18] sm:$0xff]
  %v45 = vld [vmem:[%s0 + $0x20] sm:$0xff]
  %v46 = vld [vmem:[%s0 + $0x28] sm:$0xff]
  %v47 = vld [vmem:[%s0 + $0x30] sm:$0xff]
  %v48 = vld [vmem:[%s0 + $0x38] sm:$0xff]
  %v49 = vld [vmem:[%s0 + $0x40] sm:$0xff]
  %v50 = vld [vmem:[%s0 + $0x48] sm:$0xff]
  %v51 = vld [vmem:[%s0 + $0x50] sm:$0xff]
  %v52 = vld [vmem:[%s0 + $0x58] sm:$0xff]
  %v53 = vld [vmem:[%s0 + $0x60] sm:$0xff]
  %v54 = vld [vmem:[%s0 + $0x68] sm:$0xff]
  %v55 = vld [vmem:[%s0 + $0x70] sm:$0xff]
  %v56 = vld [vmem:[%s0 + $0x78] sm:$0xff]
  %v57 = vld [vmem:[%s0 + $0x80] sm:$0xff]
  %v58 = vld [vmem:[%s0 + $0x88] sm:$0xff]
  %v59 = vld [vmem:[%s0 + $0x90] sm:$0xff]
  %v60 = vld [vmem:[%s0 + $0x98] sm:$0xff]
  %v61 = vld [vmem:[%s0 + $0xa0] sm:$0xff]
  %v62 = vld [vmem:[%s0 + $0xa8] sm:$0xff]
  %v63 = vld [vmem:[%s0 + $0xb0] sm:$0xff]
  %v64 = vld [vmem:[%s0 + $0xb8] sm:$0xff]
  %v65 = vld [vmem:[%s0 + $0xc0] sm:$0xff]
  %v66 = vld [vmem:[%s0 + $0xc8] sm:$0xff]
  %v67 = vld [vmem:[%s0 + $0xd0] sm:$0xff]
  %v68 = vld [vmem:[%s0 + $0xd8] sm:$0xff]
  %v69 = vld [vmem:[%s0 + $0xe0] sm:$0xff]
  %v70 = vld [vmem:[%s0 + $0xe8] sm:$0xff]
  %v71 = vld [vmem:[%s0 + $0xf0] sm:$0xff]
  %v72 = vld [vmem:[%s0 + $0xf8] sm:$0xff]
  %v73 = vld [vmem:[%s4] sm:$0xff]
  %v74 = vld [vmem:[%s4 + $0x8] sm:$0xff]
  %v75 = vld [vmem:[%s1] sm:$0xff]
  %v76 = vld [vmem:[%s1 + $0x8] sm:$0xff]
  %v77 = vld [vmem:[%s1 + $0x10] sm:$0xff]
  %v78 = vld [vmem:[%s1 + $0x18] sm:$0xff]
  %v79 = vld [vmem:[%s1 + $0x20] sm:$0xff]
  %v80 = vld [vmem:[%s1 + $0x28] sm:$0xff]
  %v81 = vld [vmem:[%s1 + $0x30] sm:$0xff]
  %v82 = vld [vmem:[%s1 + $0x38] sm:$0xff]
  %v83 = vld [vmem:[%s1 + $0x40] sm:$0xff]
  %v84 = vld [vmem:[%s1 + $0x48] sm:$0xff]
  %v85 = vld [vmem:[%s1 + $0x50] sm:$0xff]
  %v86 = vld [vmem:[%s1 + $0x58] sm:$0xff]
  %v87 = vld [vmem:[%s1 + $0x60] sm:$0xff]
  %v88 = vld [vmem:[%s1 + $0x68] sm:$0xff]
  %v89 = vld [vmem:[%s1 + $0x70] sm:$0xff]
  %v90 = vld [vmem:[%s1 + $0x78] sm:$0xff]
  %v91 = vld [vmem:[%s1 + $0x80] sm:$0xff]
  %v92 = vld [vmem:[%s1 + $0x88] sm:$0xff]
  %v93 = vld [vmem:[%s1 + $0x90] sm:$0xff]
  %v94 = vld [vmem:[%s1 + $0x98] sm:$0xff]
  %v95 = vld [vmem:[%s1 + $0xa0] sm:$0xff]
  %v96 = vld [vmem:[%s1 + $0xa8] sm:$0xff]
  %v97 = vld [vmem:[%s1 + $0xb0] sm:$0xff]
  %v98 = vld [vmem:[%s1 + $0xb8] sm:$0xff]
  %v99 = vld [vmem:[%s1 + $0xc0] sm:$0xff]
  %v100 = vld [vmem:[%s1 + $0xc8] sm:$0xff]
  %v101 = vld [vmem:[%s1 + $0xd0] sm:$0xff]
  %v102 = vld [vmem:[%s1 + $0xd8] sm:$0xff]
  %v103 = vld [vmem:[%s1 + $0xe0] sm:$0xff]
  %v104 = vld [vmem:[%s1 + $0xe8] sm:$0xff]
  %v105 = vld [vmem:[%s1 + $0xf0] sm:$0xff]
  %v106 = vld [vmem:[%s1 + $0xf8] sm:$0xff]
  %v107 = vld [vmem:[%s5] sm:$0xf]
  %vm108 = vcmask 31744
  %v110 = vsel %vm108, %v75, 0
  %v113 = vsel %vm108, %v76, 0
  %v116 = vsel %vm108, %v77, 0
  %v119 = vsel %vm108, %v78, 0
  %v122 = vsel %vm108, %v79, 0
  %v125 = vsel %vm108, %v80, 0
  %v128 = vsel %vm108, %v81, 0
  %v131 = vsel %vm108, %v82, 0
  %v134 = vsel %vm108, %v83, 0
  %v137 = vsel %vm108, %v84, 0
  %v140 = vsel %vm108, %v85, 0
  %v143 = vsel %vm108, %v86, 0
  %v146 = vsel %vm108, %v87, 0
  %v149 = vsel %vm108, %v88, 0
  %v152 = vsel %vm108, %v89, 0
  %v155 = vsel %vm108, %v90, 0
  %v158 = vsel %vm108, %v91, 0
  %v161 = vsel %vm108, %v92, 0
  %v164 = vsel %vm108, %v93, 0
  %v167 = vsel %vm108, %v94, 0
  %v170 = vsel %vm108, %v95, 0
  %v173 = vsel %vm108, %v96, 0
  %v176 = vsel %vm108, %v97, 0
  %v179 = vsel %vm108, %v98, 0
  %v182 = vsel %vm108, %v99, 0
  %v185 = vsel %vm108, %v100, 0
  %v188 = vsel %vm108, %v101, 0
  %v191 = vsel %vm108, %v102, 0
  %v194 = vsel %vm108, %v103, 0
  %v197 = vsel %vm108, %v104, 0
  %v200 = vsel %vm108, %v105, 0
  %v203 = vsel %vm108, %v106, 0
  %vm205 = vcmask 1043456
  %v207 = vsel %vm205, %v107, 0
  %209 = vmatprep.subr.mxu0 0.0
  %210 = vmatpush1.msra.mxu0 %v207
  %211 = vmatprep.subr.mxu0 0.0
  %212 = vmatpush1.msra.mxu0 0.0
  %213 = vmatprep.subr.mxu0 0.0
  %214 = vmatpush1.msra.mxu0 0.0
  %215 = vmatprep.subr.mxu0 0.0
  %216 = vmatpush1.msra.mxu0 0.0
  %217 = vmatprep.subr.mxu0 0.0
  %218 = vmatpush1.msra.mxu0 0.0
  %219 = vmatprep.subr.mxu0 0.0
  %220 = vmatpush1.msra.mxu0 0.0
  %221 = vmatprep.subr.mxu0 0.0
  %222 = vmatpush1.msra.mxu0 0.0
  %223 = vmatprep.subr.mxu0 0.0
  %224 = vmatpush1.msra.mxu0 0.0
  %225 = vmatprep.subr.mxu0 0.0
  %226 = vmatpush1.msra.mxu0 0.0
  %227 = vmatprep.subr.mxu0 0.0
  %228 = vmatpush1.msra.mxu0 0.0
  %229 = vmatprep.subr.mxu0 0.0
  %230 = vmatpush1.msra.mxu0 0.0
  %231 = vmatprep.subr.mxu0 0.0
  %232 = vmatpush1.msra.mxu0 0.0
  %233 = vmatprep.subr.mxu0 0.0
  %234 = vmatpush1.msra.mxu0 0.0
  %235 = vmatprep.subr.mxu0 0.0
  %236 = vmatpush1.msra.mxu0 0.0
  %237 = vmatprep.subr.mxu0 0.0
  %238 = vmatpush1.msra.mxu0 0.0
  %239 = vmatprep.subr.mxu0 0.0
  %240 = vmatpush1.msra.mxu0 0.0
  %241 = vmatprep.subr.mxu0 0.0
  %242 = vmatpush1.msra.mxu0 0.0
  %243 = vmatprep.subr.mxu0 0.0
  %244 = vmatpush1.msra.mxu0 0.0
  %245 = vmatprep.subr.mxu0 0.0
  %246 = vmatpush1.msra.mxu0 0.0
  %247 = vmatprep.subr.mxu0 0.0
  %248 = vmatpush1.msra.mxu0 0.0
  %249 = vmatprep.subr.mxu0 0.0
  %250 = vmatpush1.msra.mxu0 0.0
  %251 = vmatprep.subr.mxu0 0.0
  %252 = vmatpush1.msra.mxu0 0.0
  %253 = vmatprep.subr.mxu0 0.0
  %254 = vmatpush1.msra.mxu0 0.0
  %255 = vmatprep.subr.mxu0 0.0
  %256 = vmatpush1.msra.mxu0 0.0
  %257 = vmatprep.subr.mxu0 0.0
  %258 = vmatpush1.msra.mxu0 0.0
  %259 = vmatprep.subr.mxu0 0.0
  %260 = vmatpush1.msra.mxu0 0.0
  %261 = vmatprep.subr.mxu0 0.0
  %262 = vmatpush1.msra.mxu0 0.0
  %263 = vmatprep.subr.mxu0 0.0
  %264 = vmatpush1.msra.mxu0 0.0
  %265 = vmatprep.subr.mxu0 0.0
  %266 = vmatpush1.msra.mxu0 0.0
  %267 = vmatprep.subr.mxu0 0.0
  %268 = vmatpush1.msra.mxu0 0.0
  %269 = vmatprep.subr.mxu0 0.0
  %270 = vmatpush1.msra.mxu0 0.0
  %271 = vmatprep.subr.mxu0 0.0
  %272 = vmatpush1.msra.mxu0 0.0
  %273 = vmatprep.mubr.f32.mxu0 0.0
  %274 = vmatmul.mubr.f32.gmra.mrb[0].mxu0 %v110
  %v275 = vpop.f32.mrb[0].mxu0
  %v276 = vadd.f32 0.0, %v275
  %v277 = vpop.f32.mrb[0].mxu0
  %278 = vmatprep.mubr.f32.mxu0 0.0
  %279 = vmatmul.mubr.f32.gmra.mrb[0].mxu0 %v113
  %v280 = vpop.f32.mrb[0].mxu0
  %v281 = vadd.f32 0.0, %v280
  %v282 = vpop.f32.mrb[0].mxu0
  %283 = vmatprep.mubr.f32.mxu0 0.0
  %284 = vmatmul.mubr.f32.gmra.mrb[0].mxu0 %v116
  %v285 = vpop.f32.mrb[0].mxu0
  %v286 = vadd.f32 0.0, %v285
  %v287 = vpop.f32.mrb[0].mxu0
  %288 = vmatprep.mubr.f32.mxu0 0.0
  %289 = vmatmul.mubr.f32.gmra.mrb[0].mxu0 %v119
  %v290 = vpop.f32.mrb[0].mxu0
  %v291 = vadd.f32 0.0, %v290
  %v292 = vpop.f32.mrb[0].mxu0
  %293 = vmatprep.mubr.f32.mxu0 0.0
  %294 = vmatmul.mubr.f32.gmra.mrb[0].mxu0 %v122
  %v295 = vpop.f32.mrb[0].mxu0
  %v296 = vadd.f32 0.0, %v295
  %v297 = vpop.f32.mrb[0].mxu0
  %298 = vmatprep.mubr.f32.mxu0 0.0
  %299 = vmatmul.mubr.f32.gmra.mrb[0].mxu0 %v125
  %v300 = vpop.f32.mrb[0].mxu0
  %v301 = vadd.f32 0.0, %v300
  %v302 = vpop.f32.mrb[0].mxu0
  %303 = vmatprep.mubr.f32.mxu0 0.0
  %304 = vmatmul.mubr.f32.gmra.mrb[0].mxu0 %v128
  %v305 = vpop.f32.mrb[0].mxu0
  %v306 = vadd.f32 0.0, %v305
  %v307 = vpop.f32.mrb[0].mxu0
  %308 = vmatprep.mubr.f32.mxu0 0.0
  %309 = vmatmul.mubr.f32.gmra.mrb[0].mxu0 %v131
  %v310 = vpop.f32.mrb[0].mxu0
  %v311 = vadd.f32 0.0, %v310
  %v312 = vpop.f32.mrb[0].mxu0
  %313 = vmatprep.mubr.f32.mxu0 0.0
  %314 = vmatmul.mubr.f32.gmra.mrb[0].mxu0 %v134
  %v315 = vpop.f32.mrb[0].mxu0
  %v316 = vadd.f32 0.0, %v315
  %v317 = vpop.f32.mrb[0].mxu0
  %318 = vmatprep.mubr.f32.mxu0 0.0
  %319 = vmatmul.mubr.f32.gmra.mrb[0].mxu0 %v137
  %v320 = vpop.f32.mrb[0].mxu0
  %v321 = vadd.f32 0.0, %v320
  %v322 = vpop.f32.mrb[0].mxu0
  %323 = vmatprep.mubr.f32.mxu0 0.0
  %324 = vmatmul.mubr.f32.gmra.mrb[0].mxu0 %v140
  %v325 = vpop.f32.mrb[0].mxu0
  %v326 = vadd.f32 0.0, %v325
  %v327 = vpop.f32.mrb[0].mxu0
  %328 = vmatprep.mubr.f32.mxu0 0.0
  %329 = vmatmul.mubr.f32.gmra.mrb[0].mxu0 %v143
  %v330 = vpop.f32.mrb[0].mxu0
  %v331 = vadd.f32 0.0, %v330
  %v332 = vpop.f32.mrb[0].mxu0
  %333 = vmatprep.mubr.f32.mxu0 0.0
  %334 = vmatmul.mubr.f32.gmra.mrb[0].mxu0 %v146
  %v335 = vpop.f32.mrb[0].mxu0
  %v336 = vadd.f32 0.0, %v335
  %v337 = vpop.f32.mrb[0].mxu0
  %338 = vmatprep.mubr.f32.mxu0 0.0
  %339 = vmatmul.mubr.f32.gmra.mrb[0].mxu0 %v149
  %v340 = vpop.f32.mrb[0].mxu0
  %v341 = vadd.f32 0.0, %v340
  %v342 = vpop.f32.mrb[0].mxu0
  %343 = vmatprep.mubr.f32.mxu0 0.0
  %344 = vmatmul.mubr.f32.gmra.mrb[0].mxu0 %v152
  %v345 = vpop.f32.mrb[0].mxu0
  %v346 = vadd.f32 0.0, %v345
  %v347 = vpop.f32.mrb[0].mxu0
  %348 = vmatprep.mubr.f32.mxu0 0.0
  %349 = vmatmul.mubr.f32.gmra.mrb[0].mxu0 %v155
  %v350 = vpop.f32.mrb[0].mxu0
  %v351 = vadd.f32 0.0, %v350
  %v352 = vpop.f32.mrb[0].mxu0
  %353 = vmatprep.mubr.f32.mxu0 0.0
  %354 = vmatmul.mubr.f32.gmra.mrb[0].mxu0 %v158
  %v355 = vpop.f32.mrb[0].mxu0
  %v356 = vadd.f32 0.0, %v355
  %v357 = vpop.f32.mrb[0].mxu0
  %358 = vmatprep.mubr.f32.mxu0 0.0
  %359 = vmatmul.mubr.f32.gmra.mrb[0].mxu0 %v161
  %v360 = vpop.f32.mrb[0].mxu0
  %v361 = vadd.f32 0.0, %v360
  %v362 = vpop.f32.mrb[0].mxu0
  %363 = vmatprep.mubr.f32.mxu0 0.0
  %364 = vmatmul.mubr.f32.gmra.mrb[0].mxu0 %v164
  %v365 = vpop.f32.mrb[0].mxu0
  %v366 = vadd.f32 0.0, %v365
  %v367 = vpop.f32.mrb[0].mxu0
  %368 = vmatprep.mubr.f32.mxu0 0.0
  %369 = vmatmul.mubr.f32.gmra.mrb[0].mxu0 %v167
  %v370 = vpop.f32.mrb[0].mxu0
  %v371 = vadd.f32 0.0, %v370
  %v372 = vpop.f32.mrb[0].mxu0
  %373 = vmatprep.mubr.f32.mxu0 0.0
  %374 = vmatmul.mubr.f32.gmra.mrb[0].mxu0 %v170
  %v375 = vpop.f32.mrb[0].mxu0
  %v376 = vadd.f32 0.0, %v375
  %v377 = vpop.f32.mrb[0].mxu0
  %378 = vmatprep.mubr.f32.mxu0 0.0
  %379 = vmatmul.mubr.f32.gmra.mrb[0].mxu0 %v173
  %v380 = vpop.f32.mrb[0].mxu0
  %v381 = vadd.f32 0.0, %v380
  %v382 = vpop.f32.mrb[0].mxu0
  %383 = vmatprep.mubr.f32.mxu0 0.0
  %384 = vmatmul.mubr.f32.gmra.mrb[0].mxu0 %v176
  %v385 = vpop.f32.mrb[0].mxu0
  %v386 = vadd.f32 0.0, %v385
  %v387 = vpop.f32.mrb[0].mxu0
  %388 = vmatprep.mubr.f32.mxu0 0.0
  %389 = vmatmul.mubr.f32.gmra.mrb[0].mxu0 %v179
  %v390 = vpop.f32.mrb[0].mxu0
  %v391 = vadd.f32 0.0, %v390
  %v392 = vpop.f32.mrb[0].mxu0
  %393 = vmatprep.mubr.f32.mxu0 0.0
  %394 = vmatmul.mubr.f32.gmra.mrb[0].mxu0 %v182
  %v395 = vpop.f32.mrb[0].mxu0
  %v396 = vadd.f32 0.0, %v395
  %v397 = vpop.f32.mrb[0].mxu0
  %398 = vmatprep.mubr.f32.mxu0 0.0
  %399 = vmatmul.mubr.f32.gmra.mrb[0].mxu0 %v185
  %v400 = vpop.f32.mrb[0].mxu0
  %v401 = vadd.f32 0.0, %v400
  %v402 = vpop.f32.mrb[0].mxu0
  %403 = vmatprep.mubr.f32.mxu0 0.0
  %404 = vmatmul.mubr.f32.gmra.mrb[0].mxu0 %v188
  %v405 = vpop.f32.mrb[0].mxu0
  %v406 = vadd.f32 0.0, %v405
  %v407 = vpop.f32.mrb[0].mxu0
  %408 = vmatprep.mubr.f32.mxu0 0.0
  %409 = vmatmul.mubr.f32.gmra.mrb[0].mxu0 %v191
  %v410 = vpop.f32.mrb[0].mxu0
  %v411 = vadd.f32 0.0, %v410
  %v412 = vpop.f32.mrb[0].mxu0
  %413 = vmatprep.mubr.f32.mxu0 0.0
  %414 = vmatmul.mubr.f32.gmra.mrb[0].mxu0 %v194
  %v415 = vpop.f32.mrb[0].mxu0
  %v416 = vadd.f32 0.0, %v415
  %v417 = vpop.f32.mrb[0].mxu0
  %418 = vmatprep.mubr.f32.mxu0 0.0
  %419 = vmatmul.mubr.f32.gmra.mrb[0].mxu0 %v197
  %v420 = vpop.f32.mrb[0].mxu0
  %v421 = vadd.f32 0.0, %v420
  %v422 = vpop.f32.mrb[0].mxu0
  %423 = vmatprep.mubr.f32.mxu0 0.0
  %424 = vmatmul.mubr.f32.gmra.mrb[0].mxu0 %v200
  %v425 = vpop.f32.mrb[0].mxu0
  %v426 = vadd.f32 0.0, %v425
  %v427 = vpop.f32.mrb[0].mxu0
  %428 = vmatprep.mubr.f32.mxu0 0.0
  %429 = vmatmul.mubr.f32.gmra.mrb[0].mxu0 %v203
  %v430 = vpop.f32.mrb[0].mxu0
  %v431 = vadd.f32 0.0, %v430
  %v432 = vpop.f32.mrb[0].mxu0
  %433 = vdwg.mxu0
  %vm434 = vcmask 130048
  %v436 = vsel %vm434, %v41, 0
  %v439 = vsel %vm434, %v42, 0
  %v442 = vsel %vm434, %v43, 0
  %v445 = vsel %vm434, %v44, 0
  %v448 = vsel %vm434, %v45, 0
  %v451 = vsel %vm434, %v46, 0
  %v454 = vsel %vm434, %v47, 0
  %v457 = vsel %vm434, %v48, 0
  %v460 = vsel %vm434, %v49, 0
  %v463 = vsel %vm434, %v50, 0
  %v466 = vsel %vm434, %v51, 0
  %v469 = vsel %vm434, %v52, 0
  %v472 = vsel %vm434, %v53, 0
  %v475 = vsel %vm434, %v54, 0
  %v478 = vsel %vm434, %v55, 0
  %v481 = vsel %vm434, %v56, 0
  %v484 = vsel %vm434, %v57, 0
  %v487 = vsel %vm434, %v58, 0
  %v490 = vsel %vm434, %v59, 0
  %v493 = vsel %vm434, %v60, 0
  %v496 = vsel %vm434, %v61, 0
  %v499 = vsel %vm434, %v62, 0
  %v502 = vsel %vm434, %v63, 0
  %v505 = vsel %vm434, %v64, 0
  %v508 = vsel %vm434, %v65, 0
  %v511 = vsel %vm434, %v66, 0
  %v514 = vsel %vm434, %v67, 0
  %v517 = vsel %vm434, %v68, 0
  %v520 = vsel %vm434, %v69, 0
  %v523 = vsel %vm434, %v70, 0
  %v526 = vsel %vm434, %v71, 0
  %v529 = vsel %vm434, %v72, 0
  %531 = vmatprep.subr.mxu0 0.0
  %532 = vmatpush1.msra.mxu0 %v73
  %533 = vmatprep.subr.mxu0 0.0
  %534 = vmatpush1.msra.mxu0 %v74
  %535 = vmatprep.subr.mxu0 0.0
  %536 = vmatpush1.msra.mxu0 0.0
  %537 = vmatprep.subr.mxu0 0.0
  %538 = vmatpush1.msra.mxu0 0.0
  %539 = vmatprep.subr.mxu0 0.0
  %540 = vmatpush1.msra.mxu0 0.0
  %541 = vmatprep.subr.mxu0 0.0
  %542 = vmatpush1.msra.mxu0 0.0
  %543 = vmatprep.subr.mxu0 0.0
  %544 = vmatpush1.msra.mxu0 0.0
  %545 = vmatprep.subr.mxu0 0.0
  %546 = vmatpush1.msra.mxu0 0.0
  %547 = vmatprep.subr.mxu0 0.0
  %548 = vmatpush1.msra.mxu0 0.0
  %549 = vmatprep.subr.mxu0 0.0
  %550 = vmatpush1.msra.mxu0 0.0
  %551 = vmatprep.subr.mxu0 0.0
  %552 = vmatpush1.msra.mxu0 0.0
  %553 = vmatprep.subr.mxu0 0.0
  %554 = vmatpush1.msra.mxu0 0.0
  %555 = vmatprep.subr.mxu0 0.0
  %556 = vmatpush1.msra.mxu0 0.0
  %557 = vmatprep.subr.mxu0 0.0
  %558 = vmatpush1.msra.mxu0 0.0
  %559 = vmatprep.subr.mxu0 0.0
  %560 = vmatpush1.msra.mxu0 0.0
  %561 = vmatprep.subr.mxu0 0.0
  %562 = vmatpush1.msra.mxu0 0.0
  %563 = vmatprep.subr.mxu0 0.0
  %564 = vmatpush1.msra.mxu0 0.0
  %565 = vmatprep.subr.mxu0 0.0
  %566 = vmatpush1.msra.mxu0 0.0
  %567 = vmatprep.subr.mxu0 0.0
  %568 = vmatpush1.msra.mxu0 0.0
  %569 = vmatprep.subr.mxu0 0.0
  %570 = vmatpush1.msra.mxu0 0.0
  %571 = vmatprep.subr.mxu0 0.0
  %572 = vmatpush1.msra.mxu0 0.0
  %573 = vmatprep.subr.mxu0 0.0
  %574 = vmatpush1.msra.mxu0 0.0
  %575 = vmatprep.subr.mxu0 0.0
  %576 = vmatpush1.msra.mxu0 0.0
  %577 = vmatprep.subr.mxu0 0.0
  %578 = vmatpush1.msra.mxu0 0.0
  %579 = vmatprep.subr.mxu0 0.0
  %580 = vmatpush1.msra.mxu0 0.0
  %581 = vmatprep.subr.mxu0 0.0
  %582 = vmatpush1.msra.mxu0 0.0
  %583 = vmatprep.subr.mxu0 0.0
  %584 = vmatpush1.msra.mxu0 0.0
  %585 = vmatprep.subr.mxu0 0.0
  %586 = vmatpush1.msra.mxu0 0.0
  %587 = vmatprep.subr.mxu0 0.0
  %588 = vmatpush1.msra.mxu0 0.0
  %589 = vmatprep.subr.mxu0 0.0
  %590 = vmatpush1.msra.mxu0 0.0
  %591 = vmatprep.subr.mxu0 0.0
  %592 = vmatpush1.msra.mxu0 0.0
  %593 = vmatprep.subr.mxu0 0.0
  %594 = vmatpush1.msra.mxu0 0.0
  %595 = vmatprep.mubr.f32.mxu0 0.0
  %596 = vmatmul.mubr.f32.gmra.mrb[0].mxu0 %v436
  %v597 = vpop.f32.mrb[0].mxu0
  %v598 = vadd.f32 %v276, %v597
  %v599 = vpop.f32.mrb[0].mxu0
  %600 = vmatprep.mubr.f32.mxu0 0.0
  %601 = vmatmul.mubr.f32.gmra.mrb[0].mxu0 %v439
  %v602 = vpop.f32.mrb[0].mxu0
  %v603 = vadd.f32 %v281, %v602
  %v604 = vpop.f32.mrb[0].mxu0
  %605 = vmatprep.mubr.f32.mxu0 0.0
  %606 = vmatmul.mubr.f32.gmra.mrb[0].mxu0 %v442
  %v607 = vpop.f32.mrb[0].mxu0
  %v608 = vadd.f32 %v286, %v607
  %v609 = vpop.f32.mrb[0].mxu0
  %610 = vmatprep.mubr.f32.mxu0 0.0
  %611 = vmatmul.mubr.f32.gmra.mrb[0].mxu0 %v445
  %v612 = vpop.f32.mrb[0].mxu0
  %v613 = vadd.f32 %v291, %v612
  %v614 = vpop.f32.mrb[0].mxu0
  %615 = vmatprep.mubr.f32.mxu0 0.0
  %616 = vmatmul.mubr.f32.gmra.mrb[0].mxu0 %v448
  %v617 = vpop.f32.mrb[0].mxu0
  %v618 = vadd.f32 %v296, %v617
  %v619 = vpop.f32.mrb[0].mxu0
  %620 = vmatprep.mubr.f32.mxu0 0.0
  %621 = vmatmul.mubr.f32.gmra.mrb[0].mxu0 %v451
  %v622 = vpop.f32.mrb[0].mxu0
  %v623 = vadd.f32 %v301, %v622
  %v624 = vpop.f32.mrb[0].mxu0
  %625 = vmatprep.mubr.f32.mxu0 0.0
  %626 = vmatmul.mubr.f32.gmra.mrb[0].mxu0 %v454
  %v627 = vpop.f32.mrb[0].mxu0
  %v628 = vadd.f32 %v306, %v627
  %v629 = vpop.f32.mrb[0].mxu0
  %630 = vmatprep.mubr.f32.mxu0 0.0
  %631 = vmatmul.mubr.f32.gmra.mrb[0].mxu0 %v457
  %v632 = vpop.f32.mrb[0].mxu0
  %v633 = vadd.f32 %v311, %v632
  %v634 = vpop.f32.mrb[0].mxu0
  %635 = vmatprep.mubr.f32.mxu0 0.0
  %636 = vmatmul.mubr.f32.gmra.mrb[0].mxu0 %v460
  %v637 = vpop.f32.mrb[0].mxu0
  %v638 = vadd.f32 %v316, %v637
  %v639 = vpop.f32.mrb[0].mxu0
  %640 = vmatprep.mubr.f32.mxu0 0.0
  %641 = vmatmul.mubr.f32.gmra.mrb[0].mxu0 %v463
  %v642 = vpop.f32.mrb[0].mxu0
  %v643 = vadd.f32 %v321, %v642
  %v644 = vpop.f32.mrb[0].mxu0
  %645 = vmatprep.mubr.f32.mxu0 0.0
  %646 = vmatmul.mubr.f32.gmra.mrb[0].mxu0 %v466
  %v647 = vpop.f32.mrb[0].mxu0
  %v648 = vadd.f32 %v326, %v647
  %v649 = vpop.f32.mrb[0].mxu0
  %650 = vmatprep.mubr.f32.mxu0 0.0
  %651 = vmatmul.mubr.f32.gmra.mrb[0].mxu0 %v469
  %v652 = vpop.f32.mrb[0].mxu0
  %v653 = vadd.f32 %v331, %v652
  %v654 = vpop.f32.mrb[0].mxu0
  %655 = vmatprep.mubr.f32.mxu0 0.0
  %656 = vmatmul.mubr.f32.gmra.mrb[0].mxu0 %v472
  %v657 = vpop.f32.mrb[0].mxu0
  %v658 = vadd.f32 %v336, %v657
  %v659 = vpop.f32.mrb[0].mxu0
  %660 = vmatprep.mubr.f32.mxu0 0.0
  %661 = vmatmul.mubr.f32.gmra.mrb[0].mxu0 %v475
  %v662 = vpop.f32.mrb[0].mxu0
  %v663 = vadd.f32 %v341, %v662
  %v664 = vpop.f32.mrb[0].mxu0
  %665 = vmatprep.mubr.f32.mxu0 0.0
  %666 = vmatmul.mubr.f32.gmra.mrb[0].mxu0 %v478
  %v667 = vpop.f32.mrb[0].mxu0
  %v668 = vadd.f32 %v346, %v667
  %v669 = vpop.f32.mrb[0].mxu0
  %670 = vmatprep.mubr.f32.mxu0 0.0
  %671 = vmatmul.mubr.f32.gmra.mrb[0].mxu0 %v481
  %v672 = vpop.f32.mrb[0].mxu0
  %v673 = vadd.f32 %v351, %v672
  %v674 = vpop.f32.mrb[0].mxu0
  %675 = vmatprep.mubr.f32.mxu0 0.0
  %676 = vmatmul.mubr.f32.gmra.mrb[0].mxu0 %v484
  %v677 = vpop.f32.mrb[0].mxu0
  %v678 = vadd.f32 %v356, %v677
  %v679 = vpop.f32.mrb[0].mxu0
  %680 = vmatprep.mubr.f32.mxu0 0.0
  %681 = vmatmul.mubr.f32.gmra.mrb[0].mxu0 %v487
  %v682 = vpop.f32.mrb[0].mxu0
  %v683 = vadd.f32 %v361, %v682
  %v684 = vpop.f32.mrb[0].mxu0
  %685 = vmatprep.mubr.f32.mxu0 0.0
  %686 = vmatmul.mubr.f32.gmra.mrb[0].mxu0 %v490
  %v687 = vpop.f32.mrb[0].mxu0
  %v688 = vadd.f32 %v366, %v687
  %v689 = vpop.f32.mrb[0].mxu0
  %690 = vmatprep.mubr.f32.mxu0 0.0
  %691 = vmatmul.mubr.f32.gmra.mrb[0].mxu0 %v493
  %v692 = vpop.f32.mrb[0].mxu0
  %v693 = vadd.f32 %v371, %v692
  %v694 = vpop.f32.mrb[0].mxu0
  %695 = vmatprep.mubr.f32.mxu0 0.0
  %696 = vmatmul.mubr.f32.gmra.mrb[0].mxu0 %v496
  %v697 = vpop.f32.mrb[0].mxu0
  %v698 = vadd.f32 %v376, %v697
  %v699 = vpop.f32.mrb[0].mxu0
  %700 = vmatprep.mubr.f32.mxu0 0.0
  %701 = vmatmul.mubr.f32.gmra.mrb[0].mxu0 %v499
  %v702 = vpop.f32.mrb[0].mxu0
  %v703 = vadd.f32 %v381, %v702
  %v704 = vpop.f32.mrb[0].mxu0
  %705 = vmatprep.mubr.f32.mxu0 0.0
  %706 = vmatmul.mubr.f32.gmra.mrb[0].mxu0 %v502
  %v707 = vpop.f32.mrb[0].mxu0
  %v708 = vadd.f32 %v386, %v707
  %v709 = vpop.f32.mrb[0].mxu0
  %710 = vmatprep.mubr.f32.mxu0 0.0
  %711 = vmatmul.mubr.f32.gmra.mrb[0].mxu0 %v505
  %v712 = vpop.f32.mrb[0].mxu0
  %v713 = vadd.f32 %v391, %v712
  %v714 = vpop.f32.mrb[0].mxu0
  %715 = vmatprep.mubr.f32.mxu0 0.0
  %716 = vmatmul.mubr.f32.gmra.mrb[0].mxu0 %v508
  %v717 = vpop.f32.mrb[0].mxu0
  %v718 = vadd.f32 %v396, %v717
  %v719 = vpop.f32.mrb[0].mxu0
  %720 = vmatprep.mubr.f32.mxu0 0.0
  %721 = vmatmul.mubr.f32.gmra.mrb[0].mxu0 %v511
  %v722 = vpop.f32.mrb[0].mxu0
  %v723 = vadd.f32 %v401, %v722
  %v724 = vpop.f32.mrb[0].mxu0
  %725 = vmatprep.mubr.f32.mxu0 0.0
  %726 = vmatmul.mubr.f32.gmra.mrb[0].mxu0 %v514
  %v727 = vpop.f32.mrb[0].mxu0
  %v728 = vadd.f32 %v406, %v727
  %v729 = vpop.f32.mrb[0].mxu0
  %730 = vmatprep.mubr.f32.mxu0 0.0
  %731 = vmatmul.mubr.f32.gmra.mrb[0].mxu0 %v517
  %v732 = vpop.f32.mrb[0].mxu0
  %v733 = vadd.f32 %v411, %v732
  %v734 = vpop.f32.mrb[0].mxu0
  %735 = vmatprep.mubr.f32.mxu0 0.0
  %736 = vmatmul.mubr.f32.gmra.mrb[0].mxu0 %v520
  %v737 = vpop.f32.mrb[0].mxu0
  %v738 = vadd.f32 %v416, %v737
  %v739 = vpop.f32.mrb[0].mxu0
  %740 = vmatprep.mubr.f32.mxu0 0.0
  %741 = vmatmul.mubr.f32.gmra.mrb[0].mxu0 %v523
  %v742 = vpop.f32.mrb[0].mxu0
  %v743 = vadd.f32 %v421, %v742
  %v744 = vpop.f32.mrb[0].mxu0
  %745 = vmatprep.mubr.f32.mxu0 0.0
  %746 = vmatmul.mubr.f32.gmra.mrb[0].mxu0 %v526
  %v747 = vpop.f32.mrb[0].mxu0
  %v748 = vadd.f32 %v426, %v747
  %v749 = vpop.f32.mrb[0].mxu0
  %750 = vmatprep.mubr.f32.mxu0 0.0
  %751 = vmatmul.mubr.f32.gmra.mrb[0].mxu0 %v529
  %v752 = vpop.f32.mrb[0].mxu0
  %v753 = vadd.f32 %v431, %v752
  %v754 = vpop.f32.mrb[0].mxu0
  %755 = vdwg.mxu0
  %v756 = vld [vmem:[%s2] sm:$0xff]
  %v757 = vld [vmem:[%s2 + $0x8] sm:$0xff]
  %v758 = vld [vmem:[%s2 + $0x10] sm:$0xff]
  %v759 = vld [vmem:[%s2 + $0x18] sm:$0xff]
  %v760 = vld [vmem:[%s2 + $0x20] sm:$0xff]
  %v761 = vld [vmem:[%s2 + $0x28] sm:$0xff]
  %v762 = vld [vmem:[%s2 + $0x30] sm:$0xff]
  %v763 = vld [vmem:[%s2 + $0x38] sm:$0xff]
  %v764 = vld [vmem:[%s2 + $0x40] sm:$0xff]
  %v765 = vld [vmem:[%s2 + $0x48] sm:$0xff]
  %v766 = vld [vmem:[%s2 + $0x50] sm:$0xff]
  %v767 = vld [vmem:[%s2 + $0x58] sm:$0xff]
  %v768 = vld [vmem:[%s2 + $0x60] sm:$0xff]
  %v769 = vld [vmem:[%s2 + $0x68] sm:$0xff]
  %v770 = vld [vmem:[%s2 + $0x70] sm:$0xff]
  %v771 = vld [vmem:[%s2 + $0x78] sm:$0xff]
  %v772 = vld [vmem:[%s2 + $0x80] sm:$0xff]
  %v773 = vld [vmem:[%s2 + $0x88] sm:$0xff]
  %v774 = vld [vmem:[%s2 + $0x90] sm:$0xff]
  %v775 = vld [vmem:[%s2 + $0x98] sm:$0xff]
  %v776 = vld [vmem:[%s2 + $0xa0] sm:$0xff]
  %v777 = vld [vmem:[%s2 + $0xa8] sm:$0xff]
  %v778 = vld [vmem:[%s2 + $0xb0] sm:$0xff]
  %v779 = vld [vmem:[%s2 + $0xb8] sm:$0xff]
  %v780 = vld [vmem:[%s2 + $0xc0] sm:$0xff]
  %v781 = vld [vmem:[%s2 + $0xc8] sm:$0xff]
  %v782 = vld [vmem:[%s2 + $0xd0] sm:$0xff]
  %v783 = vld [vmem:[%s2 + $0xd8] sm:$0xff]
  %v784 = vld [vmem:[%s2 + $0xe0] sm:$0xff]
  %v785 = vld [vmem:[%s2 + $0xe8] sm:$0xff]
  %v786 = vld [vmem:[%s2 + $0xf0] sm:$0xff]
  %v787 = vld [vmem:[%s2 + $0xf8] sm:$0xff]
  %v788 = vld [vmem:[%s6] sm:$0xff]
  %v789 = vld [vmem:[%s6 + $0x8] sm:$0xff]
  %v791 = vsel %vm434, %v756, 0
  %v794 = vsel %vm434, %v757, 0
  %v797 = vsel %vm434, %v758, 0
  %v800 = vsel %vm434, %v759, 0
  %v803 = vsel %vm434, %v760, 0
  %v806 = vsel %vm434, %v761, 0
  %v809 = vsel %vm434, %v762, 0
  %v812 = vsel %vm434, %v763, 0
  %v815 = vsel %vm434, %v764, 0
  %v818 = vsel %vm434, %v765, 0
  %v821 = vsel %vm434, %v766, 0
  %v824 = vsel %vm434, %v767, 0
  %v827 = vsel %vm434, %v768, 0
  %v830 = vsel %vm434, %v769, 0
  %v833 = vsel %vm434, %v770, 0
  %v836 = vsel %vm434, %v771, 0
  %v839 = vsel %vm434, %v772, 0
  %v842 = vsel %vm434, %v773, 0
  %v845 = vsel %vm434, %v774, 0
  %v848 = vsel %vm434, %v775, 0
  %v851 = vsel %vm434, %v776, 0
  %v854 = vsel %vm434, %v777, 0
  %v857 = vsel %vm434, %v778, 0
  %v860 = vsel %vm434, %v779, 0
  %v863 = vsel %vm434, %v780, 0
  %v866 = vsel %vm434, %v781, 0
  %v869 = vsel %vm434, %v782, 0
  %v872 = vsel %vm434, %v783, 0
  %v875 = vsel %vm434, %v784, 0
  %v878 = vsel %vm434, %v785, 0
  %v881 = vsel %vm434, %v786, 0
  %v884 = vsel %vm434, %v787, 0
  %886 = vmatprep.subr.mxu0 0.0
  %887 = vmatpush1.msra.mxu0 %v788
  %888 = vmatprep.subr.mxu0 0.0
  %889 = vmatpush1.msra.mxu0 %v789
  %890 = vmatprep.subr.mxu0 0.0
  %891 = vmatpush1.msra.mxu0 0.0
  %892 = vmatprep.subr.mxu0 0.0
  %893 = vmatpush1.msra.mxu0 0.0
  %894 = vmatprep.subr.mxu0 0.0
  %895 = vmatpush1.msra.mxu0 0.0
  %896 = vmatprep.subr.mxu0 0.0
  %897 = vmatpush1.msra.mxu0 0.0
  %898 = vmatprep.subr.mxu0 0.0
  %899 = vmatpush1.msra.mxu0 0.0
  %900 = vmatprep.subr.mxu0 0.0
  %901 = vmatpush1.msra.mxu0 0.0
  %902 = vmatprep.subr.mxu0 0.0
  %903 = vmatpush1.msra.mxu0 0.0
  %904 = vmatprep.subr.mxu0 0.0
  %905 = vmatpush1.msra.mxu0 0.0
  %906 = vmatprep.subr.mxu0 0.0
  %907 = vmatpush1.msra.mxu0 0.0
  %908 = vmatprep.subr.mxu0 0.0
  %909 = vmatpush1.msra.mxu0 0.0
  %910 = vmatprep.subr.mxu0 0.0
  %911 = vmatpush1.msra.mxu0 0.0
  %912 = vmatprep.subr.mxu0 0.0
  %913 = vmatpush1.msra.mxu0 0.0
  %914 = vmatprep.subr.mxu0 0.0
  %915 = vmatpush1.msra.mxu0 0.0
  %916 = vmatprep.subr.mxu0 0.0
  %917 = vmatpush1.msra.mxu0 0.0
  %918 = vmatprep.subr.mxu0 0.0
  %919 = vmatpush1.msra.mxu0 0.0
  %920 = vmatprep.subr.mxu0 0.0
  %921 = vmatpush1.msra.mxu0 0.0
  %922 = vmatprep.subr.mxu0 0.0
  %923 = vmatpush1.msra.mxu0 0.0
  %924 = vmatprep.subr.mxu0 0.0
  %925 = vmatpush1.msra.mxu0 0.0
  %926 = vmatprep.subr.mxu0 0.0
  %927 = vmatpush1.msra.mxu0 0.0
  %928 = vmatprep.subr.mxu0 0.0
  %929 = vmatpush1.msra.mxu0 0.0
  %930 = vmatprep.subr.mxu0 0.0
  %931 = vmatpush1.msra.mxu0 0.0
  %932 = vmatprep.subr.mxu0 0.0
  %933 = vmatpush1.msra.mxu0 0.0
  %934 = vmatprep.subr.mxu0 0.0
  %935 = vmatpush1.msra.mxu0 0.0
  %936 = vmatprep.subr.mxu0 0.0
  %937 = vmatpush1.msra.mxu0 0.0
  %938 = vmatprep.subr.mxu0 0.0
  %939 = vmatpush1.msra.mxu0 0.0
  %940 = vmatprep.subr.mxu0 0.0
  %941 = vmatpush1.msra.mxu0 0.0
  %942 = vmatprep.subr.mxu0 0.0
  %943 = vmatpush1.msra.mxu0 0.0
  %944 = vmatprep.subr.mxu0 0.0
  %945 = vmatpush1.msra.mxu0 0.0
  %946 = vmatprep.subr.mxu0 0.0
  %947 = vmatpush1.msra.mxu0 0.0
  %948 = vmatprep.subr.mxu0 0.0
  %949 = vmatpush1.msra.mxu0 0.0
  %950 = vmatprep.mubr.f32.mxu0 0.0
  %951 = vmatmul.mubr.f32.gmra.mrb[0].mxu0 %v791
  %v952 = vpop.f32.mrb[0].mxu0
  %v953 = vadd.f32 0.0, %v952
  %v954 = vpop.f32.mrb[0].mxu0
  %955 = vmatprep.mubr.f32.mxu0 0.0
  %956 = vmatmul.mubr.f32.gmra.mrb[0].mxu0 %v794
  %v957 = vpop.f32.mrb[0].mxu0
  %v958 = vadd.f32 0.0, %v957
  %v959 = vpop.f32.mrb[0].mxu0
  %960 = vmatprep.mubr.f32.mxu0 0.0
  %961 = vmatmul.mubr.f32.gmra.mrb[0].mxu0 %v797
  %v962 = vpop.f32.mrb[0].mxu0
  %v963 = vadd.f32 0.0, %v962
  %v964 = vpop.f32.mrb[0].mxu0
  %965 = vmatprep.mubr.f32.mxu0 0.0
  %966 = vmatmul.mubr.f32.gmra.mrb[0].mxu0 %v800
  %v967 = vpop.f32.mrb[0].mxu0
  %v968 = vadd.f32 0.0, %v967
  %v969 = vpop.f32.mrb[0].mxu0
  %970 = vmatprep.mubr.f32.mxu0 0.0
  %971 = vmatmul.mubr.f32.gmra.mrb[0].mxu0 %v803
  %v972 = vpop.f32.mrb[0].mxu0
  %v973 = vadd.f32 0.0, %v972
  %v974 = vpop.f32.mrb[0].mxu0
  %975 = vmatprep.mubr.f32.mxu0 0.0
  %976 = vmatmul.mubr.f32.gmra.mrb[0].mxu0 %v806
  %v977 = vpop.f32.mrb[0].mxu0
  %v978 = vadd.f32 0.0, %v977
  %v979 = vpop.f32.mrb[0].mxu0
  %980 = vmatprep.mubr.f32.mxu0 0.0
  %981 = vmatmul.mubr.f32.gmra.mrb[0].mxu0 %v809
  %v982 = vpop.f32.mrb[0].mxu0
  %v983 = vadd.f32 0.0, %v982
  %v984 = vpop.f32.mrb[0].mxu0
  %985 = vmatprep.mubr.f32.mxu0 0.0
  %986 = vmatmul.mubr.f32.gmra.mrb[0].mxu0 %v812
  %v987 = vpop.f32.mrb[0].mxu0
  %v988 = vadd.f32 0.0, %v987
  %v989 = vpop.f32.mrb[0].mxu0
  %990 = vmatprep.mubr.f32.mxu0 0.0
  %991 = vmatmul.mubr.f32.gmra.mrb[0].mxu0 %v815
  %v992 = vpop.f32.mrb[0].mxu0
  %v993 = vadd.f32 0.0, %v992
  %v994 = vpop.f32.mrb[0].mxu0
  %995 = vmatprep.mubr.f32.mxu0 0.0
  %996 = vmatmul.mubr.f32.gmra.mrb[0].mxu0 %v818
  %v997 = vpop.f32.mrb[0].mxu0
  %v998 = vadd.f32 0.0, %v997
  %v999 = vpop.f32.mrb[0].mxu0
  %1000 = vmatprep.mubr.f32.mxu0 0.0
  %1001 = vmatmul.mubr.f32.gmra.mrb[0].mxu0 %v821
  %v1002 = vpop.f32.mrb[0].mxu0
  %v1003 = vadd.f32 0.0, %v1002
  %v1004 = vpop.f32.mrb[0].mxu0
  %1005 = vmatprep.mubr.f32.mxu0 0.0
  %1006 = vmatmul.mubr.f32.gmra.mrb[0].mxu0 %v824
  %v1007 = vpop.f32.mrb[0].mxu0
  %v1008 = vadd.f32 0.0, %v1007
  %v1009 = vpop.f32.mrb[0].mxu0
  %1010 = vmatprep.mubr.f32.mxu0 0.0
  %1011 = vmatmul.mubr.f32.gmra.mrb[0].mxu0 %v827
  %v1012 = vpop.f32.mrb[0].mxu0
  %v1013 = vadd.f32 0.0, %v1012
  %v1014 = vpop.f32.mrb[0].mxu0
  %1015 = vmatprep.mubr.f32.mxu0 0.0
  %1016 = vmatmul.mubr.f32.gmra.mrb[0].mxu0 %v830
  %v1017 = vpop.f32.mrb[0].mxu0
  %v1018 = vadd.f32 0.0, %v1017
  %v1019 = vpop.f32.mrb[0].mxu0
  %1020 = vmatprep.mubr.f32.mxu0 0.0
  %1021 = vmatmul.mubr.f32.gmra.mrb[0].mxu0 %v833
  %v1022 = vpop.f32.mrb[0].mxu0
  %v1023 = vadd.f32 0.0, %v1022
  %v1024 = vpop.f32.mrb[0].mxu0
  %1025 = vmatprep.mubr.f32.mxu0 0.0
  %1026 = vmatmul.mubr.f32.gmra.mrb[0].mxu0 %v836
  %v1027 = vpop.f32.mrb[0].mxu0
  %v1028 = vadd.f32 0.0, %v1027
  %v1029 = vpop.f32.mrb[0].mxu0
  %1030 = vmatprep.mubr.f32.mxu0 0.0
  %1031 = vmatmul.mubr.f32.gmra.mrb[0].mxu0 %v839
  %v1032 = vpop.f32.mrb[0].mxu0
  %v1033 = vadd.f32 0.0, %v1032
  %v1034 = vpop.f32.mrb[0].mxu0
  %1035 = vmatprep.mubr.f32.mxu0 0.0
  %1036 = vmatmul.mubr.f32.gmra.mrb[0].mxu0 %v842
  %v1037 = vpop.f32.mrb[0].mxu0
  %v1038 = vadd.f32 0.0, %v1037
  %v1039 = vpop.f32.mrb[0].mxu0
  %1040 = vmatprep.mubr.f32.mxu0 0.0
  %1041 = vmatmul.mubr.f32.gmra.mrb[0].mxu0 %v845
  %v1042 = vpop.f32.mrb[0].mxu0
  %v1043 = vadd.f32 0.0, %v1042
  %v1044 = vpop.f32.mrb[0].mxu0
  %1045 = vmatprep.mubr.f32.mxu0 0.0
  %1046 = vmatmul.mubr.f32.gmra.mrb[0].mxu0 %v848
  %v1047 = vpop.f32.mrb[0].mxu0
  %v1048 = vadd.f32 0.0, %v1047
  %v1049 = vpop.f32.mrb[0].mxu0
  %1050 = vmatprep.mubr.f32.mxu0 0.0
  %1051 = vmatmul.mubr.f32.gmra.mrb[0].mxu0 %v851
  %v1052 = vpop.f32.mrb[0].mxu0
  %v1053 = vadd.f32 0.0, %v1052
  %v1054 = vpop.f32.mrb[0].mxu0
  %1055 = vmatprep.mubr.f32.mxu0 0.0
  %1056 = vmatmul.mubr.f32.gmra.mrb[0].mxu0 %v854
  %v1057 = vpop.f32.mrb[0].mxu0
  %v1058 = vadd.f32 0.0, %v1057
  %v1059 = vpop.f32.mrb[0].mxu0
  %1060 = vmatprep.mubr.f32.mxu0 0.0
  %1061 = vmatmul.mubr.f32.gmra.mrb[0].mxu0 %v857
  %v1062 = vpop.f32.mrb[0].mxu0
  %v1063 = vadd.f32 0.0, %v1062
  %v1064 = vpop.f32.mrb[0].mxu0
  %1065 = vmatprep.mubr.f32.mxu0 0.0
  %1066 = vmatmul.mubr.f32.gmra.mrb[0].mxu0 %v860
  %v1067 = vpop.f32.mrb[0].mxu0
  %v1068 = vadd.f32 0.0, %v1067
  %v1069 = vpop.f32.mrb[0].mxu0
  %1070 = vmatprep.mubr.f32.mxu0 0.0
  %1071 = vmatmul.mubr.f32.gmra.mrb[0].mxu0 %v863
  %v1072 = vpop.f32.mrb[0].mxu0
  %v1073 = vadd.f32 0.0, %v1072
  %v1074 = vpop.f32.mrb[0].mxu0
  %1075 = vmatprep.mubr.f32.mxu0 0.0
  %1076 = vmatmul.mubr.f32.gmra.mrb[0].mxu0 %v866
  %v1077 = vpop.f32.mrb[0].mxu0
  %v1078 = vadd.f32 0.0, %v1077
  %v1079 = vpop.f32.mrb[0].mxu0
  %1080 = vmatprep.mubr.f32.mxu0 0.0
  %1081 = vmatmul.mubr.f32.gmra.mrb[0].mxu0 %v869
  %v1082 = vpop.f32.mrb[0].mxu0
  %v1083 = vadd.f32 0.0, %v1082
  %v1084 = vpop.f32.mrb[0].mxu0
  %1085 = vmatprep.mubr.f32.mxu0 0.0
  %1086 = vmatmul.mubr.f32.gmra.mrb[0].mxu0 %v872
  %v1087 = vpop.f32.mrb[0].mxu0
  %v1088 = vadd.f32 0.0, %v1087
  %v1089 = vpop.f32.mrb[0].mxu0
  %1090 = vmatprep.mubr.f32.mxu0 0.0
  %1091 = vmatmul.mubr.f32.gmra.mrb[0].mxu0 %v875
  %v1092 = vpop.f32.mrb[0].mxu0
  %v1093 = vadd.f32 0.0, %v1092
  %v1094 = vpop.f32.mrb[0].mxu0
  %1095 = vmatprep.mubr.f32.mxu0 0.0
  %1096 = vmatmul.mubr.f32.gmra.mrb[0].mxu0 %v878
  %v1097 = vpop.f32.mrb[0].mxu0
  %v1098 = vadd.f32 0.0, %v1097
  %v1099 = vpop.f32.mrb[0].mxu0
  %1100 = vmatprep.mubr.f32.mxu0 0.0
  %1101 = vmatmul.mubr.f32.gmra.mrb[0].mxu0 %v881
  %v1102 = vpop.f32.mrb[0].mxu0
  %v1103 = vadd.f32 0.0, %v1102
  %v1104 = vpop.f32.mrb[0].mxu0
  %1105 = vmatprep.mubr.f32.mxu0 0.0
  %1106 = vmatmul.mubr.f32.gmra.mrb[0].mxu0 %v884
  %v1107 = vpop.f32.mrb[0].mxu0
  %v1108 = vadd.f32 0.0, %v1107
  %v1109 = vpop.f32.mrb[0].mxu0
  %1110 = vdwg.mxu0
  %v1111 = vadd.f32 %v598, %v953
  %v1112 = vadd.f32 %v603, %v958
  %v1113 = vadd.f32 %v608, %v963
  %v1114 = vadd.f32 %v613, %v968
  %v1115 = vadd.f32 %v618, %v973
  %v1116 = vadd.f32 %v623, %v978
  %v1117 = vadd.f32 %v628, %v983
  %v1118 = vadd.f32 %v633, %v988
  %v1119 = vadd.f32 %v638, %v993
  %v1120 = vadd.f32 %v643, %v998
  %v1121 = vadd.f32 %v648, %v1003
  %v1122 = vadd.f32 %v653, %v1008
  %v1123 = vadd.f32 %v658, %v1013
  %v1124 = vadd.f32 %v663, %v1018
  %v1125 = vadd.f32 %v668, %v1023
  %v1126 = vadd.f32 %v673, %v1028
  %v1127 = vadd.f32 %v678, %v1033
  %v1128 = vadd.f32 %v683, %v1038
  %v1129 = vadd.f32 %v688, %v1043
  %v1130 = vadd.f32 %v693, %v1048
  %v1131 = vadd.f32 %v698, %v1053
  %v1132 = vadd.f32 %v703, %v1058
  %v1133 = vadd.f32 %v708, %v1063
  %v1134 = vadd.f32 %v713, %v1068
  %v1135 = vadd.f32 %v718, %v1073
  %v1136 = vadd.f32 %v723, %v1078
  %v1137 = vadd.f32 %v728, %v1083
  %v1138 = vadd.f32 %v733, %v1088
  %v1139 = vadd.f32 %v738, %v1093
  %v1140 = vadd.f32 %v743, %v1098
  %v1141 = vadd.f32 %v748, %v1103
  %v1142 = vadd.f32 %v753, %v1108
  %v1143 = vld [vmem:[%s7] sm:$0x1]
  %v1145 = vlaneseq
  %v1146 = vshrl.u32 %v1145, 7
  %v1147 = vsub.s32 0, %v1146
  %v1148 = vrot.slane %v1143, %v1147
  %v1150 = vadd.f32 %v1111, %v1148
  %v1151 = vadd.f32 %v1112, %v1148
  %v1152 = vadd.f32 %v1113, %v1148
  %v1153 = vadd.f32 %v1114, %v1148
  %v1154 = vadd.f32 %v1115, %v1148
  %v1155 = vadd.f32 %v1116, %v1148
  %v1156 = vadd.f32 %v1117, %v1148
  %v1157 = vadd.f32 %v1118, %v1148
  %v1158 = vadd.f32 %v1119, %v1148
  %v1159 = vadd.f32 %v1120, %v1148
  %v1160 = vadd.f32 %v1121, %v1148
  %v1161 = vadd.f32 %v1122, %v1148
  %v1162 = vadd.f32 %v1123, %v1148
  %v1163 = vadd.f32 %v1124, %v1148
  %v1164 = vadd.f32 %v1125, %v1148
  %v1165 = vadd.f32 %v1126, %v1148
  %v1166 = vadd.f32 %v1127, %v1148
  %v1167 = vadd.f32 %v1128, %v1148
  %v1168 = vadd.f32 %v1129, %v1148
  %v1169 = vadd.f32 %v1130, %v1148
  %v1170 = vadd.f32 %v1131, %v1148
  %v1171 = vadd.f32 %v1132, %v1148
  %v1172 = vadd.f32 %v1133, %v1148
  %v1173 = vadd.f32 %v1134, %v1148
  %v1174 = vadd.f32 %v1135, %v1148
  %v1175 = vadd.f32 %v1136, %v1148
  %v1176 = vadd.f32 %v1137, %v1148
  %v1177 = vadd.f32 %v1138, %v1148
  %v1178 = vadd.f32 %v1139, %v1148
  %v1179 = vadd.f32 %v1140, %v1148
  %v1180 = vadd.f32 %v1141, %v1148
  %v1181 = vadd.f32 %v1142, %v1148
  %v1182 = vmax.f32 %v1150, 0.0
  %v1183 = vmax.f32 %v1151, 0.0
  %v1184 = vmax.f32 %v1152, 0.0
  %v1185 = vmax.f32 %v1153, 0.0
  %v1186 = vmax.f32 %v1154, 0.0
  %v1187 = vmax.f32 %v1155, 0.0
  %v1188 = vmax.f32 %v1156, 0.0
  %v1189 = vmax.f32 %v1157, 0.0
  %v1190 = vmax.f32 %v1158, 0.0
  %v1191 = vmax.f32 %v1159, 0.0
  %v1192 = vmax.f32 %v1160, 0.0
  %v1193 = vmax.f32 %v1161, 0.0
  %v1194 = vmax.f32 %v1162, 0.0
  %v1195 = vmax.f32 %v1163, 0.0
  %v1196 = vmax.f32 %v1164, 0.0
  %v1197 = vmax.f32 %v1165, 0.0
  %v1198 = vmax.f32 %v1166, 0.0
  %v1199 = vmax.f32 %v1167, 0.0
  %v1200 = vmax.f32 %v1168, 0.0
  %v1201 = vmax.f32 %v1169, 0.0
  %v1202 = vmax.f32 %v1170, 0.0
  %v1203 = vmax.f32 %v1171, 0.0
  %v1204 = vmax.f32 %v1172, 0.0
  %v1205 = vmax.f32 %v1173, 0.0
  %v1206 = vmax.f32 %v1174, 0.0
  %v1207 = vmax.f32 %v1175, 0.0
  %v1208 = vmax.f32 %v1176, 0.0
  %v1209 = vmax.f32 %v1177, 0.0
  %v1210 = vmax.f32 %v1178, 0.0
  %v1211 = vmax.f32 %v1179, 0.0
  %v1212 = vmax.f32 %v1180, 0.0
  %v1213 = vmax.f32 %v1181, 0.0
  %v1214 = vld [vmem:[%s8] sm:$0xff]
  %v1215 = vld [vmem:[%s8 + $0x8] sm:$0xff]
  %v1216 = vld [vmem:[%s8 + $0x10] sm:$0xff]
  %v1217 = vld [vmem:[%s8 + $0x18] sm:$0xff]
  %v1218 = vld [vmem:[%s8 + $0x20] sm:$0xff]
  %v1219 = vld [vmem:[%s8 + $0x28] sm:$0xff]
  %v1220 = vld [vmem:[%s8 + $0x30] sm:$0xff]
  %v1221 = vld [vmem:[%s8 + $0x38] sm:$0xff]
  %v1222 = vld [vmem:[%s8 + $0x40] sm:$0xff]
  %v1223 = vld [vmem:[%s8 + $0x48] sm:$0xff]
  %v1224 = vld [vmem:[%s8 + $0x50] sm:$0xff]
  %v1225 = vld [vmem:[%s8 + $0x58] sm:$0xff]
  %v1226 = vld [vmem:[%s8 + $0x60] sm:$0xff]
  %v1227 = vld [vmem:[%s8 + $0x68] sm:$0xff]
  %v1228 = vld [vmem:[%s8 + $0x70] sm:$0xff]
  %v1229 = vld [vmem:[%s8 + $0x78] sm:$0xff]
  %v1230 = vld [vmem:[%s9] sm:$0x1]
  %v1232 = vlaneseq
  %v1233 = vshrl.u32 %v1232, 7
  %v1234 = vsub.s32 0, %v1233
  %v1235 = vrot.slane %v1230, %v1234
  %1237 = vmatprep.subr.mxu0 0.0
  %1238 = vmatpush1.msra.mxu0 %v1214
  %1239 = vmatprep.subr.mxu0 0.0
  %1240 = vmatpush1.msra.mxu0 %v1215
  %1241 = vmatprep.subr.mxu0 0.0
  %1242 = vmatpush1.msra.mxu0 %v1216
  %1243 = vmatprep.subr.mxu0 0.0
  %1244 = vmatpush1.msra.mxu0 %v1217
  %1245 = vmatprep.subr.mxu0 0.0
  %1246 = vmatpush1.msra.mxu0 %v1218
  %1247 = vmatprep.subr.mxu0 0.0
  %1248 = vmatpush1.msra.mxu0 %v1219
  %1249 = vmatprep.subr.mxu0 0.0
  %1250 = vmatpush1.msra.mxu0 %v1220
  %1251 = vmatprep.subr.mxu0 0.0
  %1252 = vmatpush1.msra.mxu0 %v1221
  %1253 = vmatprep.subr.mxu0 0.0
  %1254 = vmatpush1.msra.mxu0 %v1222
  %1255 = vmatprep.subr.mxu0 0.0
  %1256 = vmatpush1.msra.mxu0 %v1223
  %1257 = vmatprep.subr.mxu0 0.0
  %1258 = vmatpush1.msra.mxu0 %v1224
  %1259 = vmatprep.subr.mxu0 0.0
  %1260 = vmatpush1.msra.mxu0 %v1225
  %1261 = vmatprep.subr.mxu0 0.0
  %1262 = vmatpush1.msra.mxu0 %v1226
  %1263 = vmatprep.subr.mxu0 0.0
  %1264 = vmatpush1.msra.mxu0 %v1227
  %1265 = vmatprep.subr.mxu0 0.0
  %1266 = vmatpush1.msra.mxu0 %v1228
  %1267 = vmatprep.subr.mxu0 0.0
  %1268 = vmatpush1.msra.mxu0 %v1229
  %1269 = vmatprep.subr.mxu0 0.0
  %1270 = vmatpush1.msra.mxu0 0.0
  %1271 = vmatprep.subr.mxu0 0.0
  %1272 = vmatpush1.msra.mxu0 0.0
  %1273 = vmatprep.subr.mxu0 0.0
  %1274 = vmatpush1.msra.mxu0 0.0
  %1275 = vmatprep.subr.mxu0 0.0
  %1276 = vmatpush1.msra.mxu0 0.0
  %1277 = vmatprep.subr.mxu0 0.0
  %1278 = vmatpush1.msra.mxu0 0.0
  %1279 = vmatprep.subr.mxu0 0.0
  %1280 = vmatpush1.msra.mxu0 0.0
  %1281 = vmatprep.subr.mxu0 0.0
  %1282 = vmatpush1.msra.mxu0 0.0
  %1283 = vmatprep.subr.mxu0 0.0
  %1284 = vmatpush1.msra.mxu0 0.0
  %1285 = vmatprep.subr.mxu0 0.0
  %1286 = vmatpush1.msra.mxu0 0.0
  %1287 = vmatprep.subr.mxu0 0.0
  %1288 = vmatpush1.msra.mxu0 0.0
  %1289 = vmatprep.subr.mxu0 0.0
  %1290 = vmatpush1.msra.mxu0 0.0
  %1291 = vmatprep.subr.mxu0 0.0
  %1292 = vmatpush1.msra.mxu0 0.0
  %1293 = vmatprep.subr.mxu0 0.0
  %1294 = vmatpush1.msra.mxu0 0.0
  %1295 = vmatprep.subr.mxu0 0.0
  %1296 = vmatpush1.msra.mxu0 0.0
  %1297 = vmatprep.subr.mxu0 0.0
  %1298 = vmatpush1.msra.mxu0 0.0
  %1299 = vmatprep.subr.mxu0 0.0
  %1300 = vmatpush1.msra.mxu0 0.0
  %1301 = vmatprep.mubr.f32.mxu0 0.0
  %1302 = vmatmul.mubr.f32.gmra.mrb[0].mxu0 %v1182
  %v1303 = vpop.f32.mrb[0].mxu0
  %v1304 = vadd.f32 %v1235, %v1303
  %v1305 = vpop.f32.mrb[0].mxu0
  %1306 = vmatprep.mubr.f32.mxu0 0.0
  %1307 = vmatmul.mubr.f32.gmra.mrb[0].mxu0 %v1183
  %v1308 = vpop.f32.mrb[0].mxu0
  %v1309 = vadd.f32 %v1235, %v1308
  %v1310 = vpop.f32.mrb[0].mxu0
  %1311 = vmatprep.mubr.f32.mxu0 0.0
  %1312 = vmatmul.mubr.f32.gmra.mrb[0].mxu0 %v1184
  %v1313 = vpop.f32.mrb[0].mxu0
  %v1314 = vadd.f32 %v1235, %v1313
  %v1315 = vpop.f32.mrb[0].mxu0
  %1316 = vmatprep.mubr.f32.mxu0 0.0
  %1317 = vmatmul.mubr.f32.gmra.mrb[0].mxu0 %v1185
  %v1318 = vpop.f32.mrb[0].mxu0
  %v1319 = vadd.f32 %v1235, %v1318
  %v1320 = vpop.f32.mrb[0].mxu0
  %1321 = vmatprep.mubr.f32.mxu0 0.0
  %1322 = vmatmul.mubr.f32.gmra.mrb[0].mxu0 %v1186
  %v1323 = vpop.f32.mrb[0].mxu0
  %v1324 = vadd.f32 %v1235, %v1323
  %v1325 = vpop.f32.mrb[0].mxu0
  %1326 = vmatprep.mubr.f32.mxu0 0.0
  %1327 = vmatmul.mubr.f32.gmra.mrb[0].mxu0 %v1187
  %v1328 = vpop.f32.mrb[0].mxu0
  %v1329 = vadd.f32 %v1235, %v1328
  %v1330 = vpop.f32.mrb[0].mxu0
  %1331 = vmatprep.mubr.f32.mxu0 0.0
  %1332 = vmatmul.mubr.f32.gmra.mrb[0].mxu0 %v1188
  %v1333 = vpop.f32.mrb[0].mxu0
  %v1334 = vadd.f32 %v1235, %v1333
  %v1335 = vpop.f32.mrb[0].mxu0
  %1336 = vmatprep.mubr.f32.mxu0 0.0
  %1337 = vmatmul.mubr.f32.gmra.mrb[0].mxu0 %v1189
  %v1338 = vpop.f32.mrb[0].mxu0
  %v1339 = vadd.f32 %v1235, %v1338
  %v1340 = vpop.f32.mrb[0].mxu0
  %1341 = vmatprep.mubr.f32.mxu0 0.0
  %1342 = vmatmul.mubr.f32.gmra.mrb[0].mxu0 %v1190
  %v1343 = vpop.f32.mrb[0].mxu0
  %v1344 = vadd.f32 %v1235, %v1343
  %v1345 = vpop.f32.mrb[0].mxu0
  %1346 = vmatprep.mubr.f32.mxu0 0.0
  %1347 = vmatmul.mubr.f32.gmra.mrb[0].mxu0 %v1191
  %v1348 = vpop.f32.mrb[0].mxu0
  %v1349 = vadd.f32 %v1235, %v1348
  %v1350 = vpop.f32.mrb[0].mxu0
  %1351 = vmatprep.mubr.f32.mxu0 0.0
  %1352 = vmatmul.mubr.f32.gmra.mrb[0].mxu0 %v1192
  %v1353 = vpop.f32.mrb[0].mxu0
  %v1354 = vadd.f32 %v1235, %v1353
  %v1355 = vpop.f32.mrb[0].mxu0
  %1356 = vmatprep.mubr.f32.mxu0 0.0
  %1357 = vmatmul.mubr.f32.gmra.mrb[0].mxu0 %v1193
  %v1358 = vpop.f32.mrb[0].mxu0
  %v1359 = vadd.f32 %v1235, %v1358
  %v1360 = vpop.f32.mrb[0].mxu0
  %1361 = vmatprep.mubr.f32.mxu0 0.0
  %1362 = vmatmul.mubr.f32.gmra.mrb[0].mxu0 %v1194
  %v1363 = vpop.f32.mrb[0].mxu0
  %v1364 = vadd.f32 %v1235, %v1363
  %v1365 = vpop.f32.mrb[0].mxu0
  %1366 = vmatprep.mubr.f32.mxu0 0.0
  %1367 = vmatmul.mubr.f32.gmra.mrb[0].mxu0 %v1195
  %v1368 = vpop.f32.mrb[0].mxu0
  %v1369 = vadd.f32 %v1235, %v1368
  %v1370 = vpop.f32.mrb[0].mxu0
  %1371 = vmatprep.mubr.f32.mxu0 0.0
  %1372 = vmatmul.mubr.f32.gmra.mrb[0].mxu0 %v1196
  %v1373 = vpop.f32.mrb[0].mxu0
  %v1374 = vadd.f32 %v1235, %v1373
  %v1375 = vpop.f32.mrb[0].mxu0
  %1376 = vmatprep.mubr.f32.mxu0 0.0
  %1377 = vmatmul.mubr.f32.gmra.mrb[0].mxu0 %v1197
  %v1378 = vpop.f32.mrb[0].mxu0
  %v1379 = vadd.f32 %v1235, %v1378
  %v1380 = vpop.f32.mrb[0].mxu0
  %1381 = vmatprep.mubr.f32.mxu0 0.0
  %1382 = vmatmul.mubr.f32.gmra.mrb[0].mxu0 %v1198
  %v1383 = vpop.f32.mrb[0].mxu0
  %v1384 = vadd.f32 %v1235, %v1383
  %v1385 = vpop.f32.mrb[0].mxu0
  %1386 = vmatprep.mubr.f32.mxu0 0.0
  %1387 = vmatmul.mubr.f32.gmra.mrb[0].mxu0 %v1199
  %v1388 = vpop.f32.mrb[0].mxu0
  %v1389 = vadd.f32 %v1235, %v1388
  %v1390 = vpop.f32.mrb[0].mxu0
  %1391 = vmatprep.mubr.f32.mxu0 0.0
  %1392 = vmatmul.mubr.f32.gmra.mrb[0].mxu0 %v1200
  %v1393 = vpop.f32.mrb[0].mxu0
  %v1394 = vadd.f32 %v1235, %v1393
  %v1395 = vpop.f32.mrb[0].mxu0
  %1396 = vmatprep.mubr.f32.mxu0 0.0
  %1397 = vmatmul.mubr.f32.gmra.mrb[0].mxu0 %v1201
  %v1398 = vpop.f32.mrb[0].mxu0
  %v1399 = vadd.f32 %v1235, %v1398
  %v1400 = vpop.f32.mrb[0].mxu0
  %1401 = vmatprep.mubr.f32.mxu0 0.0
  %1402 = vmatmul.mubr.f32.gmra.mrb[0].mxu0 %v1202
  %v1403 = vpop.f32.mrb[0].mxu0
  %v1404 = vadd.f32 %v1235, %v1403
  %v1405 = vpop.f32.mrb[0].mxu0
  %1406 = vmatprep.mubr.f32.mxu0 0.0
  %1407 = vmatmul.mubr.f32.gmra.mrb[0].mxu0 %v1203
  %v1408 = vpop.f32.mrb[0].mxu0
  %v1409 = vadd.f32 %v1235, %v1408
  %v1410 = vpop.f32.mrb[0].mxu0
  %1411 = vmatprep.mubr.f32.mxu0 0.0
  %1412 = vmatmul.mubr.f32.gmra.mrb[0].mxu0 %v1204
  %v1413 = vpop.f32.mrb[0].mxu0
  %v1414 = vadd.f32 %v1235, %v1413
  %v1415 = vpop.f32.mrb[0].mxu0
  %1416 = vmatprep.mubr.f32.mxu0 0.0
  %1417 = vmatmul.mubr.f32.gmra.mrb[0].mxu0 %v1205
  %v1418 = vpop.f32.mrb[0].mxu0
  %v1419 = vadd.f32 %v1235, %v1418
  %v1420 = vpop.f32.mrb[0].mxu0
  %1421 = vmatprep.mubr.f32.mxu0 0.0
  %1422 = vmatmul.mubr.f32.gmra.mrb[0].mxu0 %v1206
  %v1423 = vpop.f32.mrb[0].mxu0
  %v1424 = vadd.f32 %v1235, %v1423
  %v1425 = vpop.f32.mrb[0].mxu0
  %1426 = vmatprep.mubr.f32.mxu0 0.0
  %1427 = vmatmul.mubr.f32.gmra.mrb[0].mxu0 %v1207
  %v1428 = vpop.f32.mrb[0].mxu0
  %v1429 = vadd.f32 %v1235, %v1428
  %v1430 = vpop.f32.mrb[0].mxu0
  %1431 = vmatprep.mubr.f32.mxu0 0.0
  %1432 = vmatmul.mubr.f32.gmra.mrb[0].mxu0 %v1208
  %v1433 = vpop.f32.mrb[0].mxu0
  %v1434 = vadd.f32 %v1235, %v1433
  %v1435 = vpop.f32.mrb[0].mxu0
  %1436 = vmatprep.mubr.f32.mxu0 0.0
  %1437 = vmatmul.mubr.f32.gmra.mrb[0].mxu0 %v1209
  %v1438 = vpop.f32.mrb[0].mxu0
  %v1439 = vadd.f32 %v1235, %v1438
  %v1440 = vpop.f32.mrb[0].mxu0
  %1441 = vmatprep.mubr.f32.mxu0 0.0
  %1442 = vmatmul.mubr.f32.gmra.mrb[0].mxu0 %v1210
  %v1443 = vpop.f32.mrb[0].mxu0
  %v1444 = vadd.f32 %v1235, %v1443
  %v1445 = vpop.f32.mrb[0].mxu0
  %1446 = vmatprep.mubr.f32.mxu0 0.0
  %1447 = vmatmul.mubr.f32.gmra.mrb[0].mxu0 %v1211
  %v1448 = vpop.f32.mrb[0].mxu0
  %v1449 = vadd.f32 %v1235, %v1448
  %v1450 = vpop.f32.mrb[0].mxu0
  %1451 = vmatprep.mubr.f32.mxu0 0.0
  %1452 = vmatmul.mubr.f32.gmra.mrb[0].mxu0 %v1212
  %v1453 = vpop.f32.mrb[0].mxu0
  %v1454 = vadd.f32 %v1235, %v1453
  %v1455 = vpop.f32.mrb[0].mxu0
  %1456 = vmatprep.mubr.f32.mxu0 0.0
  %1457 = vmatmul.mubr.f32.gmra.mrb[0].mxu0 %v1213
  %v1458 = vpop.f32.mrb[0].mxu0
  %v1459 = vadd.f32 %v1235, %v1458
  %v1460 = vpop.f32.mrb[0].mxu0
  %1461 = vdwg.mxu0
  %v1462 = vmax.f32 %v1304, 0.0
  %v1463 = vmax.f32 %v1309, 0.0
  %v1464 = vmax.f32 %v1314, 0.0
  %v1465 = vmax.f32 %v1319, 0.0
  %v1466 = vmax.f32 %v1324, 0.0
  %v1467 = vmax.f32 %v1329, 0.0
  %v1468 = vmax.f32 %v1334, 0.0
  %v1469 = vmax.f32 %v1339, 0.0
  %v1470 = vmax.f32 %v1344, 0.0
  %v1471 = vmax.f32 %v1349, 0.0
  %v1472 = vmax.f32 %v1354, 0.0
  %v1473 = vmax.f32 %v1359, 0.0
  %v1474 = vmax.f32 %v1364, 0.0
  %v1475 = vmax.f32 %v1369, 0.0
  %v1476 = vmax.f32 %v1374, 0.0
  %v1477 = vmax.f32 %v1379, 0.0
  %v1478 = vmax.f32 %v1384, 0.0
  %v1479 = vmax.f32 %v1389, 0.0
  %v1480 = vmax.f32 %v1394, 0.0
  %v1481 = vmax.f32 %v1399, 0.0
  %v1482 = vmax.f32 %v1404, 0.0
  %v1483 = vmax.f32 %v1409, 0.0
  %v1484 = vmax.f32 %v1414, 0.0
  %v1485 = vmax.f32 %v1419, 0.0
  %v1486 = vmax.f32 %v1424, 0.0
  %v1487 = vmax.f32 %v1429, 0.0
  %v1488 = vmax.f32 %v1434, 0.0
  %v1489 = vmax.f32 %v1439, 0.0
  %v1490 = vmax.f32 %v1444, 0.0
  %v1491 = vmax.f32 %v1449, 0.0
  %v1492 = vmax.f32 %v1454, 0.0
  %v1493 = vmax.f32 %v1459, 0.0
  %v1494 = vld [vmem:[%s10] sm:$0xff]
  %v1495 = vld [vmem:[%s10 + $0x8] sm:$0xff]
  %v1496 = vld [vmem:[%s10 + $0x10] sm:$0xff]
  %v1497 = vld [vmem:[%s10 + $0x18] sm:$0xff]
  %v1498 = vld [vmem:[%s10 + $0x20] sm:$0xff]
  %v1499 = vld [vmem:[%s10 + $0x28] sm:$0xff]
  %v1500 = vld [vmem:[%s10 + $0x30] sm:$0xff]
  %v1501 = vld [vmem:[%s10 + $0x38] sm:$0xff]
  %v1502 = vld [vmem:[%s10 + $0x40] sm:$0xff]
  %v1503 = vld [vmem:[%s10 + $0x48] sm:$0xff]
  %v1504 = vld [vmem:[%s10 + $0x50] sm:$0xff]
  %v1505 = vld [vmem:[%s10 + $0x58] sm:$0xff]
  %v1506 = vld [vmem:[%s10 + $0x60] sm:$0xff]
  %v1507 = vld [vmem:[%s10 + $0x68] sm:$0xff]
  %v1508 = vld [vmem:[%s10 + $0x70] sm:$0xff]
  %v1509 = vld [vmem:[%s10 + $0x78] sm:$0xff]
  %v1510 = vld [vmem:[%s11] sm:$0x1]
  %v1512 = vlaneseq
  %v1513 = vshrl.u32 %v1512, 7
  %v1514 = vsub.s32 0, %v1513
  %v1515 = vrot.slane %v1510, %v1514
  %1517 = vmatprep.subr.mxu0 0.0
  %1518 = vmatpush1.msra.mxu0 %v1494
  %1519 = vmatprep.subr.mxu0 0.0
  %1520 = vmatpush1.msra.mxu0 %v1495
  %1521 = vmatprep.subr.mxu0 0.0
  %1522 = vmatpush1.msra.mxu0 %v1496
  %1523 = vmatprep.subr.mxu0 0.0
  %1524 = vmatpush1.msra.mxu0 %v1497
  %1525 = vmatprep.subr.mxu0 0.0
  %1526 = vmatpush1.msra.mxu0 %v1498
  %1527 = vmatprep.subr.mxu0 0.0
  %1528 = vmatpush1.msra.mxu0 %v1499
  %1529 = vmatprep.subr.mxu0 0.0
  %1530 = vmatpush1.msra.mxu0 %v1500
  %1531 = vmatprep.subr.mxu0 0.0
  %1532 = vmatpush1.msra.mxu0 %v1501
  %1533 = vmatprep.subr.mxu0 0.0
  %1534 = vmatpush1.msra.mxu0 %v1502
  %1535 = vmatprep.subr.mxu0 0.0
  %1536 = vmatpush1.msra.mxu0 %v1503
  %1537 = vmatprep.subr.mxu0 0.0
  %1538 = vmatpush1.msra.mxu0 %v1504
  %1539 = vmatprep.subr.mxu0 0.0
  %1540 = vmatpush1.msra.mxu0 %v1505
  %1541 = vmatprep.subr.mxu0 0.0
  %1542 = vmatpush1.msra.mxu0 %v1506
  %1543 = vmatprep.subr.mxu0 0.0
  %1544 = vmatpush1.msra.mxu0 %v1507
  %1545 = vmatprep.subr.mxu0 0.0
  %1546 = vmatpush1.msra.mxu0 %v1508
  %1547 = vmatprep.subr.mxu0 0.0
  %1548 = vmatpush1.msra.mxu0 %v1509
  %1549 = vmatprep.subr.mxu0 0.0
  %1550 = vmatpush1.msra.mxu0 0.0
  %1551 = vmatprep.subr.mxu0 0.0
  %1552 = vmatpush1.msra.mxu0 0.0
  %1553 = vmatprep.subr.mxu0 0.0
  %1554 = vmatpush1.msra.mxu0 0.0
  %1555 = vmatprep.subr.mxu0 0.0
  %1556 = vmatpush1.msra.mxu0 0.0
  %1557 = vmatprep.subr.mxu0 0.0
  %1558 = vmatpush1.msra.mxu0 0.0
  %1559 = vmatprep.subr.mxu0 0.0
  %1560 = vmatpush1.msra.mxu0 0.0
  %1561 = vmatprep.subr.mxu0 0.0
  %1562 = vmatpush1.msra.mxu0 0.0
  %1563 = vmatprep.subr.mxu0 0.0
  %1564 = vmatpush1.msra.mxu0 0.0
  %1565 = vmatprep.subr.mxu0 0.0
  %1566 = vmatpush1.msra.mxu0 0.0
  %1567 = vmatprep.subr.mxu0 0.0
  %1568 = vmatpush1.msra.mxu0 0.0
  %1569 = vmatprep.subr.mxu0 0.0
  %1570 = vmatpush1.msra.mxu0 0.0
  %1571 = vmatprep.subr.mxu0 0.0
  %1572 = vmatpush1.msra.mxu0 0.0
  %1573 = vmatprep.subr.mxu0 0.0
  %1574 = vmatpush1.msra.mxu0 0.0
  %1575 = vmatprep.subr.mxu0 0.0
  %1576 = vmatpush1.msra.mxu0 0.0
  %1577 = vmatprep.subr.mxu0 0.0
  %1578 = vmatpush1.msra.mxu0 0.0
  %1579 = vmatprep.subr.mxu0 0.0
  %1580 = vmatpush1.msra.mxu0 0.0
  %1581 = vmatprep.mubr.f32.mxu0 0.0
  %1582 = vmatmul.mubr.f32.gmra.mrb[0].mxu0 %v1462
  %v1583 = vpop.f32.mrb[0].mxu0
  %v1584 = vadd.f32 %v1515, %v1583
  %v1585 = vpop.f32.mrb[0].mxu0
  %1586 = vmatprep.mubr.f32.mxu0 0.0
  %1587 = vmatmul.mubr.f32.gmra.mrb[0].mxu0 %v1463
  %v1588 = vpop.f32.mrb[0].mxu0
  %v1589 = vadd.f32 %v1515, %v1588
  %v1590 = vpop.f32.mrb[0].mxu0
  %1591 = vmatprep.mubr.f32.mxu0 0.0
  %1592 = vmatmul.mubr.f32.gmra.mrb[0].mxu0 %v1464
  %v1593 = vpop.f32.mrb[0].mxu0
  %v1594 = vadd.f32 %v1515, %v1593
  %v1595 = vpop.f32.mrb[0].mxu0
  %1596 = vmatprep.mubr.f32.mxu0 0.0
  %1597 = vmatmul.mubr.f32.gmra.mrb[0].mxu0 %v1465
  %v1598 = vpop.f32.mrb[0].mxu0
  %v1599 = vadd.f32 %v1515, %v1598
  %v1600 = vpop.f32.mrb[0].mxu0
  %1601 = vmatprep.mubr.f32.mxu0 0.0
  %1602 = vmatmul.mubr.f32.gmra.mrb[0].mxu0 %v1466
  %v1603 = vpop.f32.mrb[0].mxu0
  %v1604 = vadd.f32 %v1515, %v1603
  %v1605 = vpop.f32.mrb[0].mxu0
  %1606 = vmatprep.mubr.f32.mxu0 0.0
  %1607 = vmatmul.mubr.f32.gmra.mrb[0].mxu0 %v1467
  %v1608 = vpop.f32.mrb[0].mxu0
  %v1609 = vadd.f32 %v1515, %v1608
  %v1610 = vpop.f32.mrb[0].mxu0
  %1611 = vmatprep.mubr.f32.mxu0 0.0
  %1612 = vmatmul.mubr.f32.gmra.mrb[0].mxu0 %v1468
  %v1613 = vpop.f32.mrb[0].mxu0
  %v1614 = vadd.f32 %v1515, %v1613
  %v1615 = vpop.f32.mrb[0].mxu0
  %1616 = vmatprep.mubr.f32.mxu0 0.0
  %1617 = vmatmul.mubr.f32.gmra.mrb[0].mxu0 %v1469
  %v1618 = vpop.f32.mrb[0].mxu0
  %v1619 = vadd.f32 %v1515, %v1618
  %v1620 = vpop.f32.mrb[0].mxu0
  %1621 = vmatprep.mubr.f32.mxu0 0.0
  %1622 = vmatmul.mubr.f32.gmra.mrb[0].mxu0 %v1470
  %v1623 = vpop.f32.mrb[0].mxu0
  %v1624 = vadd.f32 %v1515, %v1623
  %v1625 = vpop.f32.mrb[0].mxu0
  %1626 = vmatprep.mubr.f32.mxu0 0.0
  %1627 = vmatmul.mubr.f32.gmra.mrb[0].mxu0 %v1471
  %v1628 = vpop.f32.mrb[0].mxu0
  %v1629 = vadd.f32 %v1515, %v1628
  %v1630 = vpop.f32.mrb[0].mxu0
  %1631 = vmatprep.mubr.f32.mxu0 0.0
  %1632 = vmatmul.mubr.f32.gmra.mrb[0].mxu0 %v1472
  %v1633 = vpop.f32.mrb[0].mxu0
  %v1634 = vadd.f32 %v1515, %v1633
  %v1635 = vpop.f32.mrb[0].mxu0
  %1636 = vmatprep.mubr.f32.mxu0 0.0
  %1637 = vmatmul.mubr.f32.gmra.mrb[0].mxu0 %v1473
  %v1638 = vpop.f32.mrb[0].mxu0
  %v1639 = vadd.f32 %v1515, %v1638
  %v1640 = vpop.f32.mrb[0].mxu0
  %1641 = vmatprep.mubr.f32.mxu0 0.0
  %1642 = vmatmul.mubr.f32.gmra.mrb[0].mxu0 %v1474
  %v1643 = vpop.f32.mrb[0].mxu0
  %v1644 = vadd.f32 %v1515, %v1643
  %v1645 = vpop.f32.mrb[0].mxu0
  %1646 = vmatprep.mubr.f32.mxu0 0.0
  %1647 = vmatmul.mubr.f32.gmra.mrb[0].mxu0 %v1475
  %v1648 = vpop.f32.mrb[0].mxu0
  %v1649 = vadd.f32 %v1515, %v1648
  %v1650 = vpop.f32.mrb[0].mxu0
  %1651 = vmatprep.mubr.f32.mxu0 0.0
  %1652 = vmatmul.mubr.f32.gmra.mrb[0].mxu0 %v1476
  %v1653 = vpop.f32.mrb[0].mxu0
  %v1654 = vadd.f32 %v1515, %v1653
  %v1655 = vpop.f32.mrb[0].mxu0
  %1656 = vmatprep.mubr.f32.mxu0 0.0
  %1657 = vmatmul.mubr.f32.gmra.mrb[0].mxu0 %v1477
  %v1658 = vpop.f32.mrb[0].mxu0
  %v1659 = vadd.f32 %v1515, %v1658
  %v1660 = vpop.f32.mrb[0].mxu0
  %1661 = vmatprep.mubr.f32.mxu0 0.0
  %1662 = vmatmul.mubr.f32.gmra.mrb[0].mxu0 %v1478
  %v1663 = vpop.f32.mrb[0].mxu0
  %v1664 = vadd.f32 %v1515, %v1663
  %v1665 = vpop.f32.mrb[0].mxu0
  %1666 = vmatprep.mubr.f32.mxu0 0.0
  %1667 = vmatmul.mubr.f32.gmra.mrb[0].mxu0 %v1479
  %v1668 = vpop.f32.mrb[0].mxu0
  %v1669 = vadd.f32 %v1515, %v1668
  %v1670 = vpop.f32.mrb[0].mxu0
  %1671 = vmatprep.mubr.f32.mxu0 0.0
  %1672 = vmatmul.mubr.f32.gmra.mrb[0].mxu0 %v1480
  %v1673 = vpop.f32.mrb[0].mxu0
  %v1674 = vadd.f32 %v1515, %v1673
  %v1675 = vpop.f32.mrb[0].mxu0
  %1676 = vmatprep.mubr.f32.mxu0 0.0
  %1677 = vmatmul.mubr.f32.gmra.mrb[0].mxu0 %v1481
  %v1678 = vpop.f32.mrb[0].mxu0
  %v1679 = vadd.f32 %v1515, %v1678
  %v1680 = vpop.f32.mrb[0].mxu0
  %1681 = vmatprep.mubr.f32.mxu0 0.0
  %1682 = vmatmul.mubr.f32.gmra.mrb[0].mxu0 %v1482
  %v1683 = vpop.f32.mrb[0].mxu0
  %v1684 = vadd.f32 %v1515, %v1683
  %v1685 = vpop.f32.mrb[0].mxu0
  %1686 = vmatprep.mubr.f32.mxu0 0.0
  %1687 = vmatmul.mubr.f32.gmra.mrb[0].mxu0 %v1483
  %v1688 = vpop.f32.mrb[0].mxu0
  %v1689 = vadd.f32 %v1515, %v1688
  %v1690 = vpop.f32.mrb[0].mxu0
  %1691 = vmatprep.mubr.f32.mxu0 0.0
  %1692 = vmatmul.mubr.f32.gmra.mrb[0].mxu0 %v1484
  %v1693 = vpop.f32.mrb[0].mxu0
  %v1694 = vadd.f32 %v1515, %v1693
  %v1695 = vpop.f32.mrb[0].mxu0
  %1696 = vmatprep.mubr.f32.mxu0 0.0
  %1697 = vmatmul.mubr.f32.gmra.mrb[0].mxu0 %v1485
  %v1698 = vpop.f32.mrb[0].mxu0
  %v1699 = vadd.f32 %v1515, %v1698
  %v1700 = vpop.f32.mrb[0].mxu0
  %1701 = vmatprep.mubr.f32.mxu0 0.0
  %1702 = vmatmul.mubr.f32.gmra.mrb[0].mxu0 %v1486
  %v1703 = vpop.f32.mrb[0].mxu0
  %v1704 = vadd.f32 %v1515, %v1703
  %v1705 = vpop.f32.mrb[0].mxu0
  %1706 = vmatprep.mubr.f32.mxu0 0.0
  %1707 = vmatmul.mubr.f32.gmra.mrb[0].mxu0 %v1487
  %v1708 = vpop.f32.mrb[0].mxu0
  %v1709 = vadd.f32 %v1515, %v1708
  %v1710 = vpop.f32.mrb[0].mxu0
  %1711 = vmatprep.mubr.f32.mxu0 0.0
  %1712 = vmatmul.mubr.f32.gmra.mrb[0].mxu0 %v1488
  %v1713 = vpop.f32.mrb[0].mxu0
  %v1714 = vadd.f32 %v1515, %v1713
  %v1715 = vpop.f32.mrb[0].mxu0
  %1716 = vmatprep.mubr.f32.mxu0 0.0
  %1717 = vmatmul.mubr.f32.gmra.mrb[0].mxu0 %v1489
  %v1718 = vpop.f32.mrb[0].mxu0
  %v1719 = vadd.f32 %v1515, %v1718
  %v1720 = vpop.f32.mrb[0].mxu0
  %1721 = vmatprep.mubr.f32.mxu0 0.0
  %1722 = vmatmul.mubr.f32.gmra.mrb[0].mxu0 %v1490
  %v1723 = vpop.f32.mrb[0].mxu0
  %v1724 = vadd.f32 %v1515, %v1723
  %v1725 = vpop.f32.mrb[0].mxu0
  %1726 = vmatprep.mubr.f32.mxu0 0.0
  %1727 = vmatmul.mubr.f32.gmra.mrb[0].mxu0 %v1491
  %v1728 = vpop.f32.mrb[0].mxu0
  %v1729 = vadd.f32 %v1515, %v1728
  %v1730 = vpop.f32.mrb[0].mxu0
  %1731 = vmatprep.mubr.f32.mxu0 0.0
  %1732 = vmatmul.mubr.f32.gmra.mrb[0].mxu0 %v1492
  %v1733 = vpop.f32.mrb[0].mxu0
  %v1734 = vadd.f32 %v1515, %v1733
  %v1735 = vpop.f32.mrb[0].mxu0
  %1736 = vmatprep.mubr.f32.mxu0 0.0
  %1737 = vmatmul.mubr.f32.gmra.mrb[0].mxu0 %v1493
  %v1738 = vpop.f32.mrb[0].mxu0
  %v1739 = vadd.f32 %v1515, %v1738
  %v1740 = vpop.f32.mrb[0].mxu0
  %1741 = vdwg.mxu0
  %v1742 = vld [vmem:[%s3] sm:$0xff]
  %v1743 = vld [vmem:[%s3 + $0x8] sm:$0xff]
  %v1744 = vld [vmem:[%s3 + $0x10] sm:$0xff]
  %v1745 = vld [vmem:[%s3 + $0x18] sm:$0xff]
  %v1746 = vld [vmem:[%s3 + $0x20] sm:$0xff]
  %v1747 = vld [vmem:[%s3 + $0x28] sm:$0xff]
  %v1748 = vld [vmem:[%s3 + $0x30] sm:$0xff]
  %v1749 = vld [vmem:[%s3 + $0x38] sm:$0xff]
  %v1750 = vld [vmem:[%s3 + $0x40] sm:$0xff]
  %v1751 = vld [vmem:[%s3 + $0x48] sm:$0xff]
  %v1752 = vld [vmem:[%s3 + $0x50] sm:$0xff]
  %v1753 = vld [vmem:[%s3 + $0x58] sm:$0xff]
  %v1754 = vld [vmem:[%s3 + $0x60] sm:$0xff]
  %v1755 = vld [vmem:[%s3 + $0x68] sm:$0xff]
  %v1756 = vld [vmem:[%s3 + $0x70] sm:$0xff]
  %v1757 = vld [vmem:[%s3 + $0x78] sm:$0xff]
  %v1758 = vld [vmem:[%s3 + $0x80] sm:$0xff]
  %v1759 = vld [vmem:[%s3 + $0x88] sm:$0xff]
  %v1760 = vld [vmem:[%s3 + $0x90] sm:$0xff]
  %v1761 = vld [vmem:[%s3 + $0x98] sm:$0xff]
  %v1762 = vld [vmem:[%s3 + $0xa0] sm:$0xff]
  %v1763 = vld [vmem:[%s3 + $0xa8] sm:$0xff]
  %v1764 = vld [vmem:[%s3 + $0xb0] sm:$0xff]
  %v1765 = vld [vmem:[%s3 + $0xb8] sm:$0xff]
  %v1766 = vld [vmem:[%s3 + $0xc0] sm:$0xff]
  %v1767 = vld [vmem:[%s3 + $0xc8] sm:$0xff]
  %v1768 = vld [vmem:[%s3 + $0xd0] sm:$0xff]
  %v1769 = vld [vmem:[%s3 + $0xd8] sm:$0xff]
  %v1770 = vld [vmem:[%s3 + $0xe0] sm:$0xff]
  %v1771 = vld [vmem:[%s3 + $0xe8] sm:$0xff]
  %v1772 = vld [vmem:[%s3 + $0xf0] sm:$0xff]
  %v1773 = vld [vmem:[%s3 + $0xf8] sm:$0xff]
  %1806 = vrot.lane.b32.xlu0 %v1584, 127
  %v1807 = vpop.permute.xlu0 %1806
  %1808 = vrot.lane.b32.xlu0 %v1589, 127
  %v1809 = vpop.permute.xlu0 %1808
  %1810 = vrot.lane.b32.xlu0 %v1594, 127
  %v1811 = vpop.permute.xlu0 %1810
  %1812 = vrot.lane.b32.xlu0 %v1599, 127
  %v1813 = vpop.permute.xlu0 %1812
  %1814 = vrot.lane.b32.xlu0 %v1604, 127
  %v1815 = vpop.permute.xlu0 %1814
  %1816 = vrot.lane.b32.xlu0 %v1609, 127
  %v1817 = vpop.permute.xlu0 %1816
  %1818 = vrot.lane.b32.xlu0 %v1614, 127
  %v1819 = vpop.permute.xlu0 %1818
  %1820 = vrot.lane.b32.xlu0 %v1619, 127
  %v1821 = vpop.permute.xlu0 %1820
  %1822 = vrot.lane.b32.xlu0 %v1624, 127
  %v1823 = vpop.permute.xlu0 %1822
  %1824 = vrot.lane.b32.xlu0 %v1629, 127
  %v1825 = vpop.permute.xlu0 %1824
  %1826 = vrot.lane.b32.xlu0 %v1634, 127
  %v1827 = vpop.permute.xlu0 %1826
  %1828 = vrot.lane.b32.xlu0 %v1639, 127
  %v1829 = vpop.permute.xlu0 %1828
  %1830 = vrot.lane.b32.xlu0 %v1644, 127
  %v1831 = vpop.permute.xlu0 %1830
  %1832 = vrot.lane.b32.xlu0 %v1649, 127
  %v1833 = vpop.permute.xlu0 %1832
  %1834 = vrot.lane.b32.xlu0 %v1654, 127
  %v1835 = vpop.permute.xlu0 %1834
  %1836 = vrot.lane.b32.xlu0 %v1659, 127
  %v1837 = vpop.permute.xlu0 %1836
  %1838 = vrot.lane.b32.xlu0 %v1664, 127
  %v1839 = vpop.permute.xlu0 %1838
  %1840 = vrot.lane.b32.xlu0 %v1669, 127
  %v1841 = vpop.permute.xlu0 %1840
  %1842 = vrot.lane.b32.xlu0 %v1674, 127
  %v1843 = vpop.permute.xlu0 %1842
  %1844 = vrot.lane.b32.xlu0 %v1679, 127
  %v1845 = vpop.permute.xlu0 %1844
  %1846 = vrot.lane.b32.xlu0 %v1684, 127
  %v1847 = vpop.permute.xlu0 %1846
  %1848 = vrot.lane.b32.xlu0 %v1689, 127
  %v1849 = vpop.permute.xlu0 %1848
  %1850 = vrot.lane.b32.xlu0 %v1694, 127
  %v1851 = vpop.permute.xlu0 %1850
  %1852 = vrot.lane.b32.xlu0 %v1699, 127
  %v1853 = vpop.permute.xlu0 %1852
  %1854 = vrot.lane.b32.xlu0 %v1704, 127
  %v1855 = vpop.permute.xlu0 %1854
  %1856 = vrot.lane.b32.xlu0 %v1709, 127
  %v1857 = vpop.permute.xlu0 %1856
  %1858 = vrot.lane.b32.xlu0 %v1714, 127
  %v1859 = vpop.permute.xlu0 %1858
  %1860 = vrot.lane.b32.xlu0 %v1719, 127
  %v1861 = vpop.permute.xlu0 %1860
  %1862 = vrot.lane.b32.xlu0 %v1724, 127
  %v1863 = vpop.permute.xlu0 %1862
  %1864 = vrot.lane.b32.xlu0 %v1729, 127
  %v1865 = vpop.permute.xlu0 %1864
  %1866 = vrot.lane.b32.xlu0 %v1734, 127
  %v1867 = vpop.permute.xlu0 %1866
  %1868 = vrot.lane.b32.xlu0 %v1739, 127
  %v1869 = vpop.permute.xlu0 %1868
  %v1902 = vmul.f32 %v1742, %v1807
  %v1903 = vmul.f32 %v1743, %v1809
  %v1904 = vmul.f32 %v1744, %v1811
  %v1905 = vmul.f32 %v1745, %v1813
  %v1906 = vmul.f32 %v1746, %v1815
  %v1907 = vmul.f32 %v1747, %v1817
  %v1908 = vmul.f32 %v1748, %v1819
  %v1909 = vmul.f32 %v1749, %v1821
  %v1910 = vmul.f32 %v1750, %v1823
  %v1911 = vmul.f32 %v1751, %v1825
  %v1912 = vmul.f32 %v1752, %v1827
  %v1913 = vmul.f32 %v1753, %v1829
  %v1914 = vmul.f32 %v1754, %v1831
  %v1915 = vmul.f32 %v1755, %v1833
  %v1916 = vmul.f32 %v1756, %v1835
  %v1917 = vmul.f32 %v1757, %v1837
  %v1918 = vmul.f32 %v1758, %v1839
  %v1919 = vmul.f32 %v1759, %v1841
  %v1920 = vmul.f32 %v1760, %v1843
  %v1921 = vmul.f32 %v1761, %v1845
  %v1922 = vmul.f32 %v1762, %v1847
  %v1923 = vmul.f32 %v1763, %v1849
  %v1924 = vmul.f32 %v1764, %v1851
  %v1925 = vmul.f32 %v1765, %v1853
  %v1926 = vmul.f32 %v1766, %v1855
  %v1927 = vmul.f32 %v1767, %v1857
  %v1928 = vmul.f32 %v1768, %v1859
  %v1929 = vmul.f32 %v1769, %v1861
  %v1930 = vmul.f32 %v1770, %v1863
  %v1931 = vmul.f32 %v1771, %v1865
  %v1932 = vmul.f32 %v1772, %v1867
  %v1933 = vmul.f32 %v1773, %v1869
  %v1934 = vsub.f32 %v1584, %v1902
  %v1935 = vsub.f32 %v1589, %v1903
  %v1936 = vsub.f32 %v1594, %v1904
  %v1937 = vsub.f32 %v1599, %v1905
  %v1938 = vsub.f32 %v1604, %v1906
  %v1939 = vsub.f32 %v1609, %v1907
  %v1940 = vsub.f32 %v1614, %v1908
  %v1941 = vsub.f32 %v1619, %v1909
  %v1942 = vsub.f32 %v1624, %v1910
  %v1943 = vsub.f32 %v1629, %v1911
  %v1944 = vsub.f32 %v1634, %v1912
  %v1945 = vsub.f32 %v1639, %v1913
  %v1946 = vsub.f32 %v1644, %v1914
  %v1947 = vsub.f32 %v1649, %v1915
  %v1948 = vsub.f32 %v1654, %v1916
  %v1949 = vsub.f32 %v1659, %v1917
  %v1950 = vsub.f32 %v1664, %v1918
  %v1951 = vsub.f32 %v1669, %v1919
  %v1952 = vsub.f32 %v1674, %v1920
  %v1953 = vsub.f32 %v1679, %v1921
  %v1954 = vsub.f32 %v1684, %v1922
  %v1955 = vsub.f32 %v1689, %v1923
  %v1956 = vsub.f32 %v1694, %v1924
  %v1957 = vsub.f32 %v1699, %v1925
  %v1958 = vsub.f32 %v1704, %v1926
  %v1959 = vsub.f32 %v1709, %v1927
  %v1960 = vsub.f32 %v1714, %v1928
  %v1961 = vsub.f32 %v1719, %v1929
  %v1962 = vsub.f32 %v1724, %v1930
  %v1963 = vsub.f32 %v1729, %v1931
  %v1964 = vsub.f32 %v1734, %v1932
  %v1965 = vsub.f32 %v1739, %v1933
  %vm1966 = vcmask 7168
  %1967 = vst.msk [vmem:[%s12] sm:$0xff] %vm1966, %v1934
  %1968 = vst.msk [vmem:[%s12 + $0x8] sm:$0xff] %vm1966, %v1935
  %1969 = vst.msk [vmem:[%s12 + $0x10] sm:$0xff] %vm1966, %v1936
  %1970 = vst.msk [vmem:[%s12 + $0x18] sm:$0xff] %vm1966, %v1937
  %1971 = vst.msk [vmem:[%s12 + $0x20] sm:$0xff] %vm1966, %v1938
  %1972 = vst.msk [vmem:[%s12 + $0x28] sm:$0xff] %vm1966, %v1939
  %1973 = vst.msk [vmem:[%s12 + $0x30] sm:$0xff] %vm1966, %v1940
  %1974 = vst.msk [vmem:[%s12 + $0x38] sm:$0xff] %vm1966, %v1941
  %1975 = vst.msk [vmem:[%s12 + $0x40] sm:$0xff] %vm1966, %v1942
  %1976 = vst.msk [vmem:[%s12 + $0x48] sm:$0xff] %vm1966, %v1943
  %1977 = vst.msk [vmem:[%s12 + $0x50] sm:$0xff] %vm1966, %v1944
  %1978 = vst.msk [vmem:[%s12 + $0x58] sm:$0xff] %vm1966, %v1945
  %1979 = vst.msk [vmem:[%s12 + $0x60] sm:$0xff] %vm1966, %v1946
  %1980 = vst.msk [vmem:[%s12 + $0x68] sm:$0xff] %vm1966, %v1947
  %1981 = vst.msk [vmem:[%s12 + $0x70] sm:$0xff] %vm1966, %v1948
  %1982 = vst.msk [vmem:[%s12 + $0x78] sm:$0xff] %vm1966, %v1949
  %1983 = vst.msk [vmem:[%s12 + $0x80] sm:$0xff] %vm1966, %v1950
  %1984 = vst.msk [vmem:[%s12 + $0x88] sm:$0xff] %vm1966, %v1951
  %1985 = vst.msk [vmem:[%s12 + $0x90] sm:$0xff] %vm1966, %v1952
  %1986 = vst.msk [vmem:[%s12 + $0x98] sm:$0xff] %vm1966, %v1953
  %1987 = vst.msk [vmem:[%s12 + $0xa0] sm:$0xff] %vm1966, %v1954
  %1988 = vst.msk [vmem:[%s12 + $0xa8] sm:$0xff] %vm1966, %v1955
  %1989 = vst.msk [vmem:[%s12 + $0xb0] sm:$0xff] %vm1966, %v1956
  %1990 = vst.msk [vmem:[%s12 + $0xb8] sm:$0xff] %vm1966, %v1957
  %1991 = vst.msk [vmem:[%s12 + $0xc0] sm:$0xff] %vm1966, %v1958
  %1992 = vst.msk [vmem:[%s12 + $0xc8] sm:$0xff] %vm1966, %v1959
  %1993 = vst.msk [vmem:[%s12 + $0xd0] sm:$0xff] %vm1966, %v1960
  %1994 = vst.msk [vmem:[%s12 + $0xd8] sm:$0xff] %vm1966, %v1961
  %1995 = vst.msk [vmem:[%s12 + $0xe0] sm:$0xff] %vm1966, %v1962
  %1996 = vst.msk [vmem:[%s12 + $0xe8] sm:$0xff] %vm1966, %v1963
  %1997 = vst.msk [vmem:[%s12 + $0xf0] sm:$0xff] %vm1966, %v1964
  %1998 = vst.msk [vmem:[%s12 + $0xf8] sm:$0xff] %vm1966, %v1965
  // Predicated region
  $region50: #{tpu_custom_call.1} parent=0 // pred_check
    _
  $region51: #{tpu_custom_call.1} parent=0 // pred_check_branch
    %2000 = sbr.rel (0) target = $region53
  $region52: #{tpu_custom_call.1} parent=0 // pred_region
    _
  $region53: #{tpu_custom_call.1} parent=0 // pred_fallthru
    _
  // Predicated region
  $region54: #{tpu_custom_call.1} parent=0 // pred_check
    _
  $region55: #{tpu_custom_call.1} parent=0 // pred_check_branch
    %2002 = sbr.rel (0) target = $region57
  $region56: #{tpu_custom_call.1} parent=0 // pred_region
    _
  $region57: #{tpu_custom_call.1} parent=0 // pred_fallthru
    _

</llo_original>
